<compile_context>
chip_gen: v5e
topology: v5e:2x2
jax: 0.10.0
libtpu: 0.0.40
codegen_flags: <defaults>
</compile_context>

<pallas_src>
import functools
import math

import jax
import jax.numpy as jnp
from jax.experimental import pallas as pl
from jax.experimental.pallas import tpu as pltpu

EPS = 1e-5  # nn.LayerNorm / nn.BatchNorm1d default eps

# Matmul weights (stacked bf16, one BlockSpec each, leading layer dim).
MAT_NAMES = (
    "ff1_w1", "ff1_w2",
    "att_wqkv", "att_wo",
    "cv_pw1a_w", "cv_pw1b_w", "cv_pw2_w",
    "ff2_w1", "ff2_w2",
)


def _vec_names(kernel_size):
    """Tiny per-layer vectors packed into a single (n_vec, pad_dim) f32 slab."""
    return ([
        "ff1_ln_g", "ff1_ln_b", "ff1_b1", "ff1_b2",
        "att_bqkv", "att_bo", "att_ln_g", "att_ln_b",
        "cv_ln_g", "cv_ln_b", "cv_pw1a_b", "cv_pw1b_b", "cv_dw_b", "cv_pw2_b",
        "ff2_ln_g", "ff2_ln_b", "ff2_b1", "ff2_b2",
        "fin_ln_g", "fin_ln_b",
    ] + [f"cv_dw_{k}" for k in range(kernel_size)])


# ----------------------------------------------------------------------------- helpers
def _layernorm(x, g, b):
    mu = jnp.mean(x, axis=-1, keepdims=True)
    var = jnp.mean((x - mu) ** 2, axis=-1, keepdims=True)
    return (x - mu) * jax.lax.rsqrt(var + EPS) * g + b


def _silu(x):
    return x * jax.nn.sigmoid(x)


def _bf(x):
    return x.astype(jnp.bfloat16)


# ----------------------------------------------------------------------------- kernel
def encoder_kernel(x_in_ref, kb_ref, vec_ref, *rest, n_head, kernel_size, vec_meta):
    """One grid step == (batch b, layer l).  x lives in the per-batch VMEM out block."""
    o_ref = rest[-1]
    mats = dict(zip(MAT_NAMES, rest[:-1]))
    layer = pl.program_id(1)

    def vec(name):
        row, width = vec_meta[name]
        return vec_ref[row:row + 1, :width]          # (1, width) f32

    # Load the encoder input into the resident output block on the first layer only.
    @pl.when(layer == 0)
    def _():
        o_ref[...] = x_in_ref[...]

    x = o_ref[...]                                   # (T, D) f32, resident across layers
    T, d_model = x.shape

    # ------------------------------------------------------------------ FFN 1 (x0.5)
    h = _layernorm(x, vec("ff1_ln_g"), vec("ff1_ln_b"))
    h = jnp.dot(_bf(h), mats["ff1_w1"][...],
                preferred_element_type=jnp.float32) + vec("ff1_b1")
    h = _silu(h)
    h = jnp.dot(_bf(h), mats["ff1_w2"][...],
                preferred_element_type=jnp.float32) + vec("ff1_b2")
    x = x + 0.5 * h

    # ------------------------------------------------------------- multi-head attention
    wqkv = mats["att_wqkv"][...]                     # (D, 3*d_attn) bf16, scale folded
    qkv = jnp.dot(_bf(x), wqkv,
                  preferred_element_type=jnp.float32) + vec("att_bqkv")
    d_attn = wqkv.shape[-1] // 3
    dk = d_attn // n_head

    qh = _bf(qkv[:, :d_attn]).reshape(T, n_head, dk)
    kh = _bf(qkv[:, d_attn:2 * d_attn]).reshape(T, n_head, dk)
    vh = _bf(qkv[:, 2 * d_attn:]).reshape(T, n_head, dk)

    # scores, head as batch dim; keep softmax math in f32
    s = jnp.einsum("qhd,khd->hqk", qh, kh,
                   preferred_element_type=jnp.float32)        # (H, T, T)
    s = s + kb_ref[...]                                       # (1, T) key-pad bias
    m = jnp.max(s, axis=-1, keepdims=True)
    e = jnp.exp(s - m)
    denom = jnp.sum(e, axis=-1, keepdims=True)
    p = e * pl.reciprocal(denom, approx=True)                 # EUP reciprocal

    ctx = jnp.einsum("hqk,khd->qhd", _bf(p), vh,
                     preferred_element_type=jnp.float32)      # (T, H, dk)
    ctx = ctx.reshape(T, d_attn)
    att = jnp.dot(_bf(ctx), mats["att_wo"][...],
                  preferred_element_type=jnp.float32) + vec("att_bo")
    x = _layernorm(att + x, vec("att_ln_g"), vec("att_ln_b"))

    # ------------------------------------------------------------------- conv module
    h = _layernorm(x, vec("cv_ln_g"), vec("cv_ln_b"))
    hb = _bf(h)
    ga = jnp.dot(hb, mats["cv_pw1a_w"][...],
                 preferred_element_type=jnp.float32) + vec("cv_pw1a_b")
    gb = jnp.dot(hb, mats["cv_pw1b_w"][...],
                 preferred_element_type=jnp.float32) + vec("cv_pw1b_b")
    glu = ga * jax.nn.sigmoid(gb)                             # (T, C)

    # depthwise conv along time ('same' zero padding); BatchNorm folded at setup.
    pad = (kernel_size - 1) // 2
    t_idx = jax.lax.broadcasted_iota(jnp.int32, (T, 1), 0)
    acc = jnp.zeros_like(glu)
    for kk in range(kernel_size):                             # static, small K
        off = kk - pad
        shifted = glu if off == 0 else pltpu.roll(glu, (-off) % T, axis=0)
        src_t = t_idx + off
        valid = jnp.logical_and(src_t >= 0, src_t < T)
        acc = acc + jnp.where(valid, shifted, 0.0) * vec(f"cv_dw_{kk}")
    acc = acc + vec("cv_dw_b")                                # BN-folded bias
    acc = _silu(acc)
    out = jnp.dot(_bf(acc), mats["cv_pw2_w"][...],
                  preferred_element_type=jnp.float32) + vec("cv_pw2_b")
    x = x + out

    # ------------------------------------------------------------------ FFN 2 (x0.5)
    h = _layernorm(x, vec("ff2_ln_g"), vec("ff2_ln_b"))
    h = jnp.dot(_bf(h), mats["ff2_w1"][...],
                preferred_element_type=jnp.float32) + vec("ff2_b1")
    h = _silu(h)
    h = jnp.dot(_bf(h), mats["ff2_w2"][...],
                preferred_element_type=jnp.float32) + vec("ff2_b2")
    x = x + 0.5 * h

    # ---------------------------------------------------------------------- final LN
    x = _layernorm(x, vec("fin_ln_g"), vec("fin_ln_b"))
    o_ref[...] = x


# ----------------------------------------------------------------------- param plumbing
def _prepare_layer(p, n_head):
    """Fuse QKV (+1/sqrt(dk) scale), split GLU weight, fold BatchNorm(eval) into the
    depthwise conv.  Pure setup-time JAX."""
    d_model, d_attn = p["att_wq"].shape
    dk = d_attn // n_head
    scale = 1.0 / math.sqrt(dk)
    c = p["cv_pw1_w"].shape[1] // 2

    bn_scale = p["cv_bn_g"] * jax.lax.rsqrt(p["cv_bn_v"] + EPS)        # (1, C)
    dw_w = p["cv_dw_w"] * bn_scale                                      # (K, C)
    dw_b = (p["cv_dw_b"] - p["cv_bn_m"]) * bn_scale + p["cv_bn_b"]      # (1, C)

    mats = {
        "ff1_w1": p["ff1_w1"], "ff1_w2": p["ff1_w2"],
        "att_wqkv": jnp.concatenate(
            [p["att_wq"] * scale, p["att_wk"], p["att_wv"]], axis=1),
        "att_wo": p["att_wo"],
        "cv_pw1a_w": p["cv_pw1_w"][:, :c], "cv_pw1b_w": p["cv_pw1_w"][:, c:],
        "cv_pw2_w": p["cv_pw2_w"],
        "ff2_w1": p["ff2_w1"], "ff2_w2": p["ff2_w2"],
    }
    vecs = {
        "ff1_ln_g": p["ff1_ln_g"], "ff1_ln_b": p["ff1_ln_b"],
        "ff1_b1": p["ff1_b1"], "ff1_b2": p["ff1_b2"],
        "att_bqkv": jnp.concatenate(
            [p["att_bq"] * scale, p["att_bk"], p["att_bv"]], axis=1),
        "att_bo": p["att_bo"],
        "att_ln_g": p["att_ln_g"], "att_ln_b": p["att_ln_b"],
        "cv_ln_g": p["cv_ln_g"], "cv_ln_b": p["cv_ln_b"],
        "cv_pw1a_b": p["cv_pw1_b"][:, :c], "cv_pw1b_b": p["cv_pw1_b"][:, c:],
        "cv_dw_b": dw_b, "cv_pw2_b": p["cv_pw2_b"],
        "ff2_ln_g": p["ff2_ln_g"], "ff2_ln_b": p["ff2_ln_b"],
        "ff2_b1": p["ff2_b1"], "ff2_b2": p["ff2_b2"],
        "fin_ln_g": p["fin_ln_g"], "fin_ln_b": p["fin_ln_b"],
    }
    for k in range(dw_w.shape[0]):
        vecs[f"cv_dw_{k}"] = dw_w[k:k + 1]
    return mats, vecs


def stack_layer_params(layer_params, n_head, kernel_size):
    """Stack per-layer weights with a leading layer dim.  Matmul weights -> bf16,
    all tiny vectors -> one f32 (L, n_vec_pad, pad_dim) slab."""
    per = [_prepare_layer(p, n_head) for p in layer_params]
    n_layers = len(per)
    vec_names = _vec_names(kernel_size)

    widths = {name: int(per[0][1][name].shape[-1]) for name in vec_names}
    pad_dim = ((max(widths.values()) + 127) // 128) * 128
    n_vec = len(vec_names)
    n_vec_pad = ((n_vec + 7) // 8) * 8
    vec_meta = {name: (i, widths[name]) for i, name in enumerate(vec_names)}

    slabs = []
    for l in range(n_layers):
        slab = jnp.zeros((n_vec_pad, pad_dim), jnp.float32)
        for i, name in enumerate(vec_names):
            v = per[l][1][name].reshape(-1).astype(jnp.float32)
            slab = slab.at[i, :v.shape[0]].set(v)
        slabs.append(slab)
    vec_slab = jnp.stack(slabs, axis=0)                       # (L, n_vec_pad, pad_dim)

    mats_stacked = [
        jnp.stack([per[l][0][name] for l in range(n_layers)], axis=0).astype(jnp.bfloat16)
        for name in MAT_NAMES
    ]
    return mats_stacked, vec_slab, vec_meta


def encoder_forward(enc_output, mask, layer_params, *, n_head, kernel_size):
    """Equivalent of Encoder.forward(enc_output, mask) with return_attns=False.

    mask: (B, T) float, 1.0 = padded position (broadcast over queries inside).
    """
    B, T, D = enc_output.shape
    n_layers = len(layer_params)
    mats_stacked, vec_slab, vec_meta = stack_layer_params(layer_params, n_head, kernel_size)

    # precomputed additive key-padding bias (f32), per batch
    key_bias = jnp.where(mask > 0.5, -1e9, 0.0).astype(jnp.float32).reshape(B, 1, T)

    in_specs = [
        # x: per-batch block, read only at layer 0; resident along the layer axis
        pl.BlockSpec((None, T, D), lambda b, l: (b, 0, 0)),
        # key-padding bias, per batch
        pl.BlockSpec((None, 1, T), lambda b, l: (b, 0, 0)),
        # packed tiny-vector slab, per layer
        pl.BlockSpec((None,) + tuple(vec_slab.shape[1:]), lambda b, l: (l, 0, 0)),
    ]
    args = [enc_output.astype(jnp.float32), key_bias, vec_slab]
    for arr in mats_stacked:
        nd = arr.ndim
        # leading layer dim indexed by the layer grid axis -> next layer prefetches
        in_specs.append(pl.BlockSpec((None,) + tuple(arr.shape[1:]),
                                     lambda b, l, _nd=nd: (l,) + (0,) * (_nd - 1)))
        args.append(arr)

    kernel = functools.partial(encoder_kernel, n_head=n_head, kernel_size=kernel_size,
                               vec_meta=vec_meta)
    return pl.pallas_call(
        kernel,
        out_shape=jax.ShapeDtypeStruct((B, T, D), jnp.float32),
        grid=(B, n_layers),
        in_specs=in_specs,
        # per-batch output block, constant index across the layer axis -> stays in VMEM
        out_specs=pl.BlockSpec((None, T, D), lambda b, l: (b, 0, 0)),
        compiler_params=pltpu.CompilerParams(
            dimension_semantics=("parallel", "arbitrary")),
    )(*args)


# ------------------------------------------------------------------------- param init
def init_conformer_block(key, d_model, d_attn, ff_expansion, conv_expansion, kernel_size):
    d_ff = d_model * ff_expansion
    c = d_model * conv_expansion
    keys = jax.random.split(key, 10)

    def lin(k, fan_in, fan_out):
        return (jax.random.normal(k, (fan_in, fan_out), jnp.float32)
                / jnp.sqrt(jnp.float32(fan_in)))

    ones = lambda n: jnp.ones((1, n), jnp.float32)
    zeros = lambda n: jnp.zeros((1, n), jnp.float32)

    p = {
        # FFN 1
        "ff1_ln_g": ones(d_model), "ff1_ln_b": zeros(d_model),
        "ff1_w1": lin(keys[0], d_model, d_ff), "ff1_b1": zeros(d_ff),
        "ff1_w2": lin(keys[1], d_ff, d_model), "ff1_b2": zeros(d_model),
        # MHSA
        "att_wq": lin(keys[2], d_model, d_attn), "att_bq": zeros(d_attn),
        "att_wk": lin(keys[3], d_model, d_attn), "att_bk": zeros(d_attn),
        "att_wv": lin(keys[4], d_model, d_attn), "att_bv": zeros(d_attn),
        "att_wo": lin(keys[5], d_attn, d_model), "att_bo": zeros(d_model),
        "att_ln_g": ones(d_model), "att_ln_b": zeros(d_model),
        # conv module
        "cv_ln_g": ones(d_model), "cv_ln_b": zeros(d_model),
        "cv_pw1_w": lin(keys[6], d_model, 2 * c), "cv_pw1_b": zeros(2 * c),
        "cv_dw_w": (jax.random.normal(keys[7], (kernel_size, c), jnp.float32)
                    / jnp.sqrt(jnp.float32(kernel_size))),
        "cv_dw_b": zeros(c),
        "cv_bn_g": ones(c), "cv_bn_b": zeros(c), "cv_bn_m": zeros(c), "cv_bn_v": ones(c),
        "cv_pw2_w": lin(keys[8], c, d_model), "cv_pw2_b": zeros(d_model),
        # FFN 2
        "ff2_ln_g": ones(d_model), "ff2_ln_b": zeros(d_model),
        "ff2_w1": lin(keys[9], d_model, d_ff), "ff2_b1": zeros(d_ff),
        "ff2_w2": lin(jax.random.fold_in(keys[9], 1), d_ff, d_model), "ff2_b2": zeros(d_model),
        # final LN
        "fin_ln_g": ones(d_model), "fin_ln_b": zeros(d_model),
    }
    return p


# --------------------------------------------------------------------------------- main
if __name__ == "__main__":
    # Encoder hyper-parameters (small, consistent with the module __init__).
    ENCODER_HIDDEN_DIM = 32     # d_model   (real FastSpeech2 sizes are lane-aligned;
    ATTENTION_DIM = 32          # d_attention; demo shapes run at partial lane occupancy)
    ENCODER_NUM_LAYER = 2
    ENCODER_NUM_HEAD = 2
    CONV_KERNEL_SIZE = 3
    FF_EXPANSION_FACTOR = 2
    CONV_EXPANSION_FACTOR = 2
    # dropouts are inference-time identities

    B, T, D = 2, 8, ENCODER_HIDDEN_DIM

    root = jax.random.PRNGKey(0)
    k_x, k_params = jax.random.split(root)

    enc_output = jax.random.normal(k_x, (B, T, D), jnp.float32)

    # mask: True (1.0) at padded positions, like `make_pad_mask` in the PyTorch code.
    lengths = jnp.array([T, 5], dtype=jnp.int32)
    mask = (jnp.arange(T)[None, :] >= lengths[:, None]).astype(jnp.float32)   # (B, T)

    layer_keys = jax.random.split(k_params, ENCODER_NUM_LAYER)
    layer_params = [
        init_conformer_block(layer_keys[i], D, ATTENTION_DIM,
                             FF_EXPANSION_FACTOR, CONV_EXPANSION_FACTOR, CONV_KERNEL_SIZE)
        for i in range(ENCODER_NUM_LAYER)
    ]

    fwd = jax.jit(functools.partial(encoder_forward,
                                    n_head=ENCODER_NUM_HEAD,
                                    kernel_size=CONV_KERNEL_SIZE))
    out = fwd(enc_output, mask, layer_params)
    out = jax.block_until_ready(out)

    assert out.shape == (B, T, D), out.shape
    assert bool(jnp.all(jnp.isfinite(out)))
    print("KERNEL_OK")
</pallas_src>

<mosaic_0001>
module attributes {stable_mosaic.version = 11 : i64} {
  func.func @encoder_kernel(%arg0: i32, %arg1: i32, %arg2: memref<1x8x32xf32, #tpu.memory_space<vmem>>, %arg3: memref<1x1x8xf32, #tpu.memory_space<vmem>>, %arg4: memref<1x24x128xf32, #tpu.memory_space<vmem>>, %arg5: memref<1x32x64xbf16, #tpu.memory_space<vmem>>, %arg6: memref<1x64x32xbf16, #tpu.memory_space<vmem>>, %arg7: memref<1x32x96xbf16, #tpu.memory_space<vmem>>, %arg8: memref<1x32x32xbf16, #tpu.memory_space<vmem>>, %arg9: memref<1x32x64xbf16, #tpu.memory_space<vmem>>, %arg10: memref<1x32x64xbf16, #tpu.memory_space<vmem>>, %arg11: memref<1x64x32xbf16, #tpu.memory_space<vmem>>, %arg12: memref<1x32x64xbf16, #tpu.memory_space<vmem>>, %arg13: memref<1x64x32xbf16, #tpu.memory_space<vmem>>, %arg14: memref<1x8x32xf32, #tpu.memory_space<vmem>>) attributes {dimension_semantics = [#tpu.dimension_semantics<parallel>, #tpu.dimension_semantics<arbitrary>], iteration_bounds = array<i64: 2, 2>, scalar_prefetch = 0 : i64, scratch_operands = 0 : i64, tpu.core_type = #tpu.core_type<tc>, window_params = [{transform_indices = @transform_0, window_bounds = array<i64: 1, 8, 32>}, {transform_indices = @transform_1, window_bounds = array<i64: 1, 1, 8>}, {transform_indices = @transform_2, window_bounds = array<i64: 1, 24, 128>}, {transform_indices = @transform_3, window_bounds = array<i64: 1, 32, 64>}, {transform_indices = @transform_4, window_bounds = array<i64: 1, 64, 32>}, {transform_indices = @transform_5, window_bounds = array<i64: 1, 32, 96>}, {transform_indices = @transform_6, window_bounds = array<i64: 1, 32, 32>}, {transform_indices = @transform_7, window_bounds = array<i64: 1, 32, 64>}, {transform_indices = @transform_8, window_bounds = array<i64: 1, 32, 64>}, {transform_indices = @transform_9, window_bounds = array<i64: 1, 64, 32>}, {transform_indices = @transform_10, window_bounds = array<i64: 1, 32, 64>}, {transform_indices = @transform_11, window_bounds = array<i64: 1, 64, 32>}, {transform_indices = @transform_12, window_bounds = array<i64: 1, 8, 32>}]} {
    %c0_i32 = arith.constant 0 : i32
    %0 = arith.cmpi eq, %arg1, %c0_i32 : i32
    %1 = arith.extui %0 : i1 to i32
    %c0_i32_0 = arith.constant 0 : i32
    %2 = arith.cmpi ne, %1, %c0_i32_0 : i32
    scf.if %2 {
      %c0_137 = arith.constant 0 : index
      %c0_138 = arith.constant 0 : index
      %c0_139 = arith.constant 0 : index
      %326 = vector.load %arg2[%c0_137, %c0_138, %c0_139] : memref<1x8x32xf32, #tpu.memory_space<vmem>>, vector<1x8x32xf32>
      %327 = vector.shape_cast %326 : vector<1x8x32xf32> to vector<8x32xf32>
      %c0_140 = arith.constant 0 : index
      %c0_141 = arith.constant 0 : index
      %c0_142 = arith.constant 0 : index
      %328 = vector.load %arg14[%c0_140, %c0_141, %c0_142] : memref<1x8x32xf32, #tpu.memory_space<vmem>>, vector<1x8x32xf32>
      %329 = vector.shape_cast %328 : vector<1x8x32xf32> to vector<8x32xf32>
      %330 = vector.shape_cast %327 : vector<8x32xf32> to vector<1x8x32xf32>
      tpu.vector_store %arg14[%c0_140, %c0_141, %c0_142], %330 {strides = array<i32>} : memref<1x8x32xf32, #tpu.memory_space<vmem>>, vector<1x8x32xf32>,
    } else {
    }
    %c0 = arith.constant 0 : index
    %c0_1 = arith.constant 0 : index
    %c0_2 = arith.constant 0 : index
    %3 = vector.load %arg14[%c0, %c0_1, %c0_2] : memref<1x8x32xf32, #tpu.memory_space<vmem>>, vector<1x8x32xf32>
    %4 = vector.shape_cast %3 : vector<1x8x32xf32> to vector<8x32xf32>
    %c0_3 = arith.constant 0 : index
    %c0_4 = arith.constant 0 : index
    %c0_5 = arith.constant 0 : index
    %5 = vector.load %arg4[%c0_3, %c0_4, %c0_5] : memref<1x24x128xf32, #tpu.memory_space<vmem>>, vector<1x1x32xf32>
    %6 = vector.shape_cast %5 : vector<1x1x32xf32> to vector<1x32xf32>
    %c0_6 = arith.constant 0 : index
    %c1 = arith.constant 1 : index
    %c0_7 = arith.constant 0 : index
    %7 = vector.load %arg4[%c0_6, %c1, %c0_7] : memref<1x24x128xf32, #tpu.memory_space<vmem>>, vector<1x1x32xf32>
    %8 = vector.shape_cast %7 : vector<1x1x32xf32> to vector<1x32xf32>
    %cst = arith.constant dense<0.000000e+00> : vector<8xf32>
    %9 = vector.multi_reduction <add>, %4, %cst [1] : vector<8x32xf32> to vector<8xf32>
    %10 = vector.shape_cast %9 : vector<8xf32> to vector<8x1xf32>
    %cst_8 = arith.constant 3.200000e+01 : f32
    %11 = vector.broadcast %cst_8 : f32 to vector<8x1xf32>
    %12 = arith.divf %10, %11 : vector<8x1xf32>
    %13 = vector.broadcast %12 : vector<8x1xf32> to vector<8x32xf32>
    %14 = arith.subf %4, %13 : vector<8x32xf32>
    %15 = arith.mulf %14, %14 : vector<8x32xf32>
    %cst_9 = arith.constant dense<0.000000e+00> : vector<8xf32>
    %16 = vector.multi_reduction <add>, %15, %cst_9 [1] : vector<8x32xf32> to vector<8xf32>
    %17 = vector.shape_cast %16 : vector<8xf32> to vector<8x1xf32>
    %cst_10 = arith.constant 3.200000e+01 : f32
    %18 = vector.broadcast %cst_10 : f32 to vector<8x1xf32>
    %19 = arith.divf %17, %18 : vector<8x1xf32>
    %20 = vector.broadcast %12 : vector<8x1xf32> to vector<8x32xf32>
    %21 = arith.subf %4, %20 : vector<8x32xf32>
    %cst_11 = arith.constant 9.99999974E-6 : f32
    %22 = vector.broadcast %cst_11 : f32 to vector<8x1xf32>
    %23 = arith.addf %19, %22 : vector<8x1xf32>
    %24 = math.rsqrt %23 : vector<8x1xf32>
    %25 = vector.broadcast %24 : vector<8x1xf32> to vector<8x32xf32>
    %26 = arith.mulf %21, %25 : vector<8x32xf32>
    %27 = vector.broadcast %6 : vector<1x32xf32> to vector<8x32xf32>
    %28 = arith.mulf %26, %27 : vector<8x32xf32>
    %29 = vector.broadcast %8 : vector<1x32xf32> to vector<8x32xf32>
    %30 = arith.addf %28, %29 : vector<8x32xf32>
    %31 = arith.truncf %30 : vector<8x32xf32> to vector<8x32xbf16>
    %c0_12 = arith.constant 0 : index
    %c0_13 = arith.constant 0 : index
    %c0_14 = arith.constant 0 : index
    %32 = vector.load %arg5[%c0_12, %c0_13, %c0_14] : memref<1x32x64xbf16, #tpu.memory_space<vmem>>, vector<1x32x64xbf16>
    %33 = vector.shape_cast %32 : vector<1x32x64xbf16> to vector<32x64xbf16>
    %cst_15 = arith.constant dense<0.000000e+00> : vector<8x64xf32>
    %34 = tpu.matmul %31, %33, %cst_15 {dimension_numbers = #tpu.dot_dimension_numbers<[1], [0], [0], [1], [0, 0, 1, 1], [], []>} : vector<8x32xbf16>, vector<32x64xbf16>, vector<8x64xf32> -> vector<8x64xf32>
    %c0_16 = arith.constant 0 : index
    %c2 = arith.constant 2 : index
    %c0_17 = arith.constant 0 : index
    %35 = vector.load %arg4[%c0_16, %c2, %c0_17] : memref<1x24x128xf32, #tpu.memory_space<vmem>>, vector<1x1x64xf32>
    %36 = vector.shape_cast %35 : vector<1x1x64xf32> to vector<1x64xf32>
    %37 = vector.broadcast %36 : vector<1x64xf32> to vector<8x64xf32>
    %38 = arith.addf %34, %37 : vector<8x64xf32>
    %39 = arith.negf %38 : vector<8x64xf32>
    %40 = math.exp %39 : vector<8x64xf32>
    %cst_18 = arith.constant 1.000000e+00 : f32
    %41 = vector.broadcast %cst_18 : f32 to vector<8x64xf32>
    %42 = arith.addf %41, %40 : vector<8x64xf32>
    %43 = arith.divf %41, %42 : vector<8x64xf32>
    %44 = arith.mulf %38, %43 : vector<8x64xf32>
    %45 = arith.truncf %44 : vector<8x64xf32> to vector<8x64xbf16>
    %c0_19 = arith.constant 0 : index
    %c0_20 = arith.constant 0 : index
    %c0_21 = arith.constant 0 : index
    %46 = vector.load %arg6[%c0_19, %c0_20, %c0_21] : memref<1x64x32xbf16, #tpu.memory_space<vmem>>, vector<1x64x32xbf16>
    %47 = vector.shape_cast %46 : vector<1x64x32xbf16> to vector<64x32xbf16>
    %cst_22 = arith.constant dense<0.000000e+00> : vector<8x32xf32>
    %48 = tpu.matmul %45, %47, %cst_22 {dimension_numbers = #tpu.dot_dimension_numbers<[1], [0], [0], [1], [0, 0, 1, 1], [], []>} : vector<8x64xbf16>, vector<64x32xbf16>, vector<8x32xf32> -> vector<8x32xf32>
    %c0_23 = arith.constant 0 : index
    %c3 = arith.constant 3 : index
    %c0_24 = arith.constant 0 : index
    %49 = vector.load %arg4[%c0_23, %c3, %c0_24] : memref<1x24x128xf32, #tpu.memory_space<vmem>>, vector<1x1x32xf32>
    %50 = vector.shape_cast %49 : vector<1x1x32xf32> to vector<1x32xf32>
    %51 = vector.broadcast %50 : vector<1x32xf32> to vector<8x32xf32>
    %52 = arith.addf %48, %51 : vector<8x32xf32>
    %cst_25 = arith.constant 5.000000e-01 : f32
    %53 = vector.broadcast %cst_25 : f32 to vector<8x32xf32>
    %54 = arith.mulf %53, %52 : vector<8x32xf32>
    %55 = arith.addf %4, %54 : vector<8x32xf32>
    %c0_26 = arith.constant 0 : index
    %c0_27 = arith.constant 0 : index
    %c0_28 = arith.constant 0 : index
    %56 = vector.load %arg7[%c0_26, %c0_27, %c0_28] : memref<1x32x96xbf16, #tpu.memory_space<vmem>>, vector<1x32x96xbf16>
    %57 = vector.shape_cast %56 : vector<1x32x96xbf16> to vector<32x96xbf16>
    %58 = arith.truncf %55 : vector<8x32xf32> to vector<8x32xbf16>
    %cst_29 = arith.constant dense<0.000000e+00> : vector<8x96xf32>
    %59 = tpu.matmul %58, %57, %cst_29 {dimension_numbers = #tpu.dot_dimension_numbers<[1], [0], [0], [1], [0, 0, 1, 1], [], []>} : vector<8x32xbf16>, vector<32x96xbf16>, vector<8x96xf32> -> vector<8x96xf32>
    %c0_30 = arith.constant 0 : index
    %c4 = arith.constant 4 : index
    %c0_31 = arith.constant 0 : index
    %60 = vector.load %arg4[%c0_30, %c4, %c0_31] : memref<1x24x128xf32, #tpu.memory_space<vmem>>, vector<1x1x96xf32>
    %61 = vector.shape_cast %60 : vector<1x1x96xf32> to vector<1x96xf32>
    %62 = vector.broadcast %61 : vector<1x96xf32> to vector<8x96xf32>
    %63 = arith.addf %59, %62 : vector<8x96xf32>
    %64 = vector.extract_strided_slice %63 {offsets = [0, 0], sizes = [8, 32], strides = [1, 1]} : vector<8x96xf32> to vector<8x32xf32>
    %65 = arith.truncf %64 : vector<8x32xf32> to vector<8x32xbf16>
    %66 = vector.shape_cast %65 : vector<8x32xbf16> to vector<8x2x16xbf16>
    %67 = vector.extract_strided_slice %63 {offsets = [0, 32], sizes = [8, 32], strides = [1, 1]} : vector<8x96xf32> to vector<8x32xf32>
    %68 = arith.truncf %67 : vector<8x32xf32> to vector<8x32xbf16>
    %69 = vector.shape_cast %68 : vector<8x32xbf16> to vector<8x2x16xbf16>
    %70 = vector.extract_strided_slice %63 {offsets = [0, 64], sizes = [8, 32], strides = [1, 1]} : vector<8x96xf32> to vector<8x32xf32>
    %71 = arith.truncf %70 : vector<8x32xf32> to vector<8x32xbf16>
    %72 = vector.shape_cast %71 : vector<8x32xbf16> to vector<8x2x16xbf16>
    "tpu.trace_start"() <{level = 10 : i32, message = "qhd,khd->hqk"}> : () -> ()
    %cst_32 = arith.constant dense<0.000000e+00> : vector<2x8x8xf32>
    %73 = tpu.matmul %66, %69, %cst_32 {dimension_numbers = #tpu.dot_dimension_numbers<[2], [2], [0], [0], [0, 1, 0, 0, 1, 0], [1], [1]>} : vector<8x2x16xbf16>, vector<8x2x16xbf16>, vector<2x8x8xf32> -> vector<2x8x8xf32>
    "tpu.trace_stop"() : () -> ()
    %c0_33 = arith.constant 0 : index
    %c0_34 = arith.constant 0 : index
    %c0_35 = arith.constant 0 : index
    %74 = vector.load %arg3[%c0_33, %c0_34, %c0_35] : memref<1x1x8xf32, #tpu.memory_space<vmem>>, vector<1x1x8xf32>
    %75 = vector.shape_cast %74 : vector<1x1x8xf32> to vector<1x8xf32>
    %76 = vector.shape_cast %75 : vector<1x8xf32> to vector<1x1x8xf32>
    %77 = vector.broadcast %76 : vector<1x1x8xf32> to vector<2x8x8xf32>
    %78 = arith.addf %73, %77 : vector<2x8x8xf32>
    %cst_36 = arith.constant dense<0xFF800000> : vector<2x8xf32>
    %79 = vector.multi_reduction <maximumf>, %78, %cst_36 [2] : vector<2x8x8xf32> to vector<2x8xf32>
    %80 = vector.shape_cast %79 : vector<2x8xf32> to vector<2x8x1xf32>
    %81 = vector.broadcast %80 : vector<2x8x1xf32> to vector<2x8x8xf32>
    %82 = arith.subf %78, %81 : vector<2x8x8xf32>
    %83 = math.exp %82 : vector<2x8x8xf32>
    %cst_37 = arith.constant dense<0.000000e+00> : vector<2x8xf32>
    %84 = vector.multi_reduction <add>, %83, %cst_37 [2] : vector<2x8x8xf32> to vector<2x8xf32>
    %85 = vector.shape_cast %84 : vector<2x8xf32> to vector<2x8x1xf32>
    %86 = tpu.reciprocal %85 {approx = true} : vector<2x8x1xf32> -> vector<2x8x1xf32>
    %87 = vector.broadcast %86 : vector<2x8x1xf32> to vector<2x8x8xf32>
    %88 = arith.mulf %83, %87 : vector<2x8x8xf32>
    %89 = arith.truncf %88 : vector<2x8x8xf32> to vector<2x8x8xbf16>
    "tpu.trace_start"() <{level = 10 : i32, message = "hqk,khd->qhd"}> : () -> ()
    %cst_38 = arith.constant dense<0.000000e+00> : vector<2x16x8xf32>
    %90 = tpu.matmul %72, %89, %cst_38 {dimension_numbers = #tpu.dot_dimension_numbers<[0], [2], [2], [1], [0, 1, 0, 2, 1, 1], [1], [0]>} : vector<8x2x16xbf16>, vector<2x8x8xbf16>, vector<2x16x8xf32> -> vector<2x16x8xf32>
    %91 = tpu.transpose %90, [2, 0, 1] : vector<2x16x8xf32> -> vector<8x2x16xf32>
    "tpu.trace_stop"() : () -> ()
    %92 = vector.shape_cast %91 : vector<8x2x16xf32> to vector<8x32xf32>
    %93 = arith.truncf %92 : vector<8x32xf32> to vector<8x32xbf16>
    %c0_39 = arith.constant 0 : index
    %c0_40 = arith.constant 0 : index
    %c0_41 = arith.constant 0 : index
    %94 = vector.load %arg8[%c0_39, %c0_40, %c0_41] : memref<1x32x32xbf16, #tpu.memory_space<vmem>>, vector<1x32x32xbf16>
    %95 = vector.shape_cast %94 : vector<1x32x32xbf16> to vector<32x32xbf16>
    %cst_42 = arith.constant dense<0.000000e+00> : vector<8x32xf32>
    %96 = tpu.matmul %93, %95, %cst_42 {dimension_numbers = #tpu.dot_dimension_numbers<[1], [0], [0], [1], [0, 0, 1, 1], [], []>} : vector<8x32xbf16>, vector<32x32xbf16>, vector<8x32xf32> -> vector<8x32xf32>
    %c0_43 = arith.constant 0 : index
    %c5 = arith.constant 5 : index
    %c0_44 = arith.constant 0 : index
    %97 = vector.load %arg4[%c0_43, %c5, %c0_44] : memref<1x24x128xf32, #tpu.memory_space<vmem>>, vector<1x1x32xf32>
    %98 = vector.shape_cast %97 : vector<1x1x32xf32> to vector<1x32xf32>
    %99 = vector.broadcast %98 : vector<1x32xf32> to vector<8x32xf32>
    %100 = arith.addf %96, %99 : vector<8x32xf32>
    %101 = arith.addf %100, %55 : vector<8x32xf32>
    %c0_45 = arith.constant 0 : index
    %c6 = arith.constant 6 : index
    %c0_46 = arith.constant 0 : index
    %102 = vector.load %arg4[%c0_45, %c6, %c0_46] : memref<1x24x128xf32, #tpu.memory_space<vmem>>, vector<1x1x32xf32>
    %103 = vector.shape_cast %102 : vector<1x1x32xf32> to vector<1x32xf32>
    %c0_47 = arith.constant 0 : index
    %c7 = arith.constant 7 : index
    %c0_48 = arith.constant 0 : index
    %104 = vector.load %arg4[%c0_47, %c7, %c0_48] : memref<1x24x128xf32, #tpu.memory_space<vmem>>, vector<1x1x32xf32>
    %105 = vector.shape_cast %104 : vector<1x1x32xf32> to vector<1x32xf32>
    %cst_49 = arith.constant dense<0.000000e+00> : vector<8xf32>
    %106 = vector.multi_reduction <add>, %101, %cst_49 [1] : vector<8x32xf32> to vector<8xf32>
    %107 = vector.shape_cast %106 : vector<8xf32> to vector<8x1xf32>
    %cst_50 = arith.constant 3.200000e+01 : f32
    %108 = vector.broadcast %cst_50 : f32 to vector<8x1xf32>
    %109 = arith.divf %107, %108 : vector<8x1xf32>
    %110 = vector.broadcast %109 : vector<8x1xf32> to vector<8x32xf32>
    %111 = arith.subf %101, %110 : vector<8x32xf32>
    %112 = arith.mulf %111, %111 : vector<8x32xf32>
    %cst_51 = arith.constant dense<0.000000e+00> : vector<8xf32>
    %113 = vector.multi_reduction <add>, %112, %cst_51 [1] : vector<8x32xf32> to vector<8xf32>
    %114 = vector.shape_cast %113 : vector<8xf32> to vector<8x1xf32>
    %cst_52 = arith.constant 3.200000e+01 : f32
    %115 = vector.broadcast %cst_52 : f32 to vector<8x1xf32>
    %116 = arith.divf %114, %115 : vector<8x1xf32>
    %117 = vector.broadcast %109 : vector<8x1xf32> to vector<8x32xf32>
    %118 = arith.subf %101, %117 : vector<8x32xf32>
    %cst_53 = arith.constant 9.99999974E-6 : f32
    %119 = vector.broadcast %cst_53 : f32 to vector<8x1xf32>
    %120 = arith.addf %116, %119 : vector<8x1xf32>
    %121 = math.rsqrt %120 : vector<8x1xf32>
    %122 = vector.broadcast %121 : vector<8x1xf32> to vector<8x32xf32>
    %123 = arith.mulf %118, %122 : vector<8x32xf32>
    %124 = vector.broadcast %103 : vector<1x32xf32> to vector<8x32xf32>
    %125 = arith.mulf %123, %124 : vector<8x32xf32>
    %126 = vector.broadcast %105 : vector<1x32xf32> to vector<8x32xf32>
    %127 = arith.addf %125, %126 : vector<8x32xf32>
    %c0_54 = arith.constant 0 : index
    %c8 = arith.constant 8 : index
    %c0_55 = arith.constant 0 : index
    %128 = vector.load %arg4[%c0_54, %c8, %c0_55] : memref<1x24x128xf32, #tpu.memory_space<vmem>>, vector<1x1x32xf32>
    %129 = vector.shape_cast %128 : vector<1x1x32xf32> to vector<1x32xf32>
    %c0_56 = arith.constant 0 : index
    %c9 = arith.constant 9 : index
    %c0_57 = arith.constant 0 : index
    %130 = vector.load %arg4[%c0_56, %c9, %c0_57] : memref<1x24x128xf32, #tpu.memory_space<vmem>>, vector<1x1x32xf32>
    %131 = vector.shape_cast %130 : vector<1x1x32xf32> to vector<1x32xf32>
    %cst_58 = arith.constant dense<0.000000e+00> : vector<8xf32>
    %132 = vector.multi_reduction <add>, %127, %cst_58 [1] : vector<8x32xf32> to vector<8xf32>
    %133 = vector.shape_cast %132 : vector<8xf32> to vector<8x1xf32>
    %cst_59 = arith.constant 3.200000e+01 : f32
    %134 = vector.broadcast %cst_59 : f32 to vector<8x1xf32>
    %135 = arith.divf %133, %134 : vector<8x1xf32>
    %136 = vector.broadcast %135 : vector<8x1xf32> to vector<8x32xf32>
    %137 = arith.subf %127, %136 : vector<8x32xf32>
    %138 = arith.mulf %137, %137 : vector<8x32xf32>
    %cst_60 = arith.constant dense<0.000000e+00> : vector<8xf32>
    %139 = vector.multi_reduction <add>, %138, %cst_60 [1] : vector<8x32xf32> to vector<8xf32>
    %140 = vector.shape_cast %139 : vector<8xf32> to vector<8x1xf32>
    %cst_61 = arith.constant 3.200000e+01 : f32
    %141 = vector.broadcast %cst_61 : f32 to vector<8x1xf32>
    %142 = arith.divf %140, %141 : vector<8x1xf32>
    %143 = vector.broadcast %135 : vector<8x1xf32> to vector<8x32xf32>
    %144 = arith.subf %127, %143 : vector<8x32xf32>
    %cst_62 = arith.constant 9.99999974E-6 : f32
    %145 = vector.broadcast %cst_62 : f32 to vector<8x1xf32>
    %146 = arith.addf %142, %145 : vector<8x1xf32>
    %147 = math.rsqrt %146 : vector<8x1xf32>
    %148 = vector.broadcast %147 : vector<8x1xf32> to vector<8x32xf32>
    %149 = arith.mulf %144, %148 : vector<8x32xf32>
    %150 = vector.broadcast %129 : vector<1x32xf32> to vector<8x32xf32>
    %151 = arith.mulf %149, %150 : vector<8x32xf32>
    %152 = vector.broadcast %131 : vector<1x32xf32> to vector<8x32xf32>
    %153 = arith.addf %151, %152 : vector<8x32xf32>
    %154 = arith.truncf %153 : vector<8x32xf32> to vector<8x32xbf16>
    %c0_63 = arith.constant 0 : index
    %c0_64 = arith.constant 0 : index
    %c0_65 = arith.constant 0 : index
    %155 = vector.load %arg9[%c0_63, %c0_64, %c0_65] : memref<1x32x64xbf16, #tpu.memory_space<vmem>>, vector<1x32x64xbf16>
    %156 = vector.shape_cast %155 : vector<1x32x64xbf16> to vector<32x64xbf16>
    %cst_66 = arith.constant dense<0.000000e+00> : vector<8x64xf32>
    %157 = tpu.matmul %154, %156, %cst_66 {dimension_numbers = #tpu.dot_dimension_numbers<[1], [0], [0], [1], [0, 0, 1, 1], [], []>} : vector<8x32xbf16>, vector<32x64xbf16>, vector<8x64xf32> -> vector<8x64xf32>
    %c0_67 = arith.constant 0 : index
    %c10 = arith.constant 10 : index
    %c0_68 = arith.constant 0 : index
    %158 = vector.load %arg4[%c0_67, %c10, %c0_68] : memref<1x24x128xf32, #tpu.memory_space<vmem>>, vector<1x1x64xf32>
    %159 = vector.shape_cast %158 : vector<1x1x64xf32> to vector<1x64xf32>
    %160 = vector.broadcast %159 : vector<1x64xf32> to vector<8x64xf32>
    %161 = arith.addf %157, %160 : vector<8x64xf32>
    %c0_69 = arith.constant 0 : index
    %c0_70 = arith.constant 0 : index
    %c0_71 = arith.constant 0 : index
    %162 = vector.load %arg10[%c0_69, %c0_70, %c0_71] : memref<1x32x64xbf16, #tpu.memory_space<vmem>>, vector<1x32x64xbf16>
    %163 = vector.shape_cast %162 : vector<1x32x64xbf16> to vector<32x64xbf16>
    %cst_72 = arith.constant dense<0.000000e+00> : vector<8x64xf32>
    %164 = tpu.matmul %154, %163, %cst_72 {dimension_numbers = #tpu.dot_dimension_numbers<[1], [0], [0], [1], [0, 0, 1, 1], [], []>} : vector<8x32xbf16>, vector<32x64xbf16>, vector<8x64xf32> -> vector<8x64xf32>
    %c0_73 = arith.constant 0 : index
    %c11 = arith.constant 11 : index
    %c0_74 = arith.constant 0 : index
    %165 = vector.load %arg4[%c0_73, %c11, %c0_74] : memref<1x24x128xf32, #tpu.memory_space<vmem>>, vector<1x1x64xf32>
    %166 = vector.shape_cast %165 : vector<1x1x64xf32> to vector<1x64xf32>
    %167 = vector.broadcast %166 : vector<1x64xf32> to vector<8x64xf32>
    %168 = arith.addf %164, %167 : vector<8x64xf32>
    %169 = arith.negf %168 : vector<8x64xf32>
    %170 = math.exp %169 : vector<8x64xf32>
    %cst_75 = arith.constant 1.000000e+00 : f32
    %171 = vector.broadcast %cst_75 : f32 to vector<8x64xf32>
    %172 = arith.addf %171, %170 : vector<8x64xf32>
    %173 = arith.divf %171, %172 : vector<8x64xf32>
    %174 = arith.mulf %161, %173 : vector<8x64xf32>
    %175 = tpu.iota {dimensions = array<i32: 0>} : vector<8x1xi32>
    %cst_76 = arith.constant 0.000000e+00 : f32
    %176 = vector.broadcast %cst_76 : f32 to vector<8x64xf32>
    %c1_i32 = arith.constant 1 : i32
    %177 = tpu.dynamic_rotate %174 by %c1_i32 dim 0 : vector<8x64xf32>, i32 -> vector<8x64xf32>
    %c-1_i32 = arith.constant -1 : i32
    %178 = vector.broadcast %c-1_i32 : i32 to vector<8x1xi32>
    %179 = arith.addi %175, %178 : vector<8x1xi32>
    %c0_i32_77 = arith.constant 0 : i32
    %180 = vector.broadcast %c0_i32_77 : i32 to vector<8x1xi32>
    %181 = arith.cmpi sge, %179, %180 : vector<8x1xi32>
    %c8_i32 = arith.constant 8 : i32
    %182 = vector.broadcast %c8_i32 : i32 to vector<8x1xi32>
    %183 = arith.cmpi slt, %179, %182 : vector<8x1xi32>
    %184 = arith.andi %181, %183 : vector<8x1xi1>
    %cst_78 = arith.constant 0.000000e+00 : f32
    %185 = vector.shape_cast %184 : vector<8x1xi1> to vector<8x1xi1>
    %186 = vector.broadcast %185 : vector<8x1xi1> to vector<8x64xi1>
    %187 = vector.broadcast %cst_78 : f32 to vector<8x64xf32>
    %188 = arith.select %186, %177, %187 : vector<8x64xi1>, vector<8x64xf32>
    %c0_79 = arith.constant 0 : index
    %c20 = arith.constant 20 : index
    %c0_80 = arith.constant 0 : index
    %189 = vector.load %arg4[%c0_79, %c20, %c0_80] : memref<1x24x128xf32, #tpu.memory_space<vmem>>, vector<1x1x64xf32>
    %190 = vector.shape_cast %189 : vector<1x1x64xf32> to vector<1x64xf32>
    %191 = vector.broadcast %190 : vector<1x64xf32> to vector<8x64xf32>
    %192 = arith.mulf %188, %191 : vector<8x64xf32>
    %193 = arith.addf %176, %192 : vector<8x64xf32>
    %c0_i32_81 = arith.constant 0 : i32
    %194 = vector.broadcast %c0_i32_81 : i32 to vector<8x1xi32>
    %195 = arith.addi %175, %194 : vector<8x1xi32>
    %c0_i32_82 = arith.constant 0 : i32
    %196 = vector.broadcast %c0_i32_82 : i32 to vector<8x1xi32>
    %197 = arith.cmpi sge, %195, %196 : vector<8x1xi32>
    %c8_i32_83 = arith.constant 8 : i32
    %198 = vector.broadcast %c8_i32_83 : i32 to vector<8x1xi32>
    %199 = arith.cmpi slt, %195, %198 : vector<8x1xi32>
    %200 = arith.andi %197, %199 : vector<8x1xi1>
    %cst_84 = arith.constant 0.000000e+00 : f32
    %201 = vector.shape_cast %200 : vector<8x1xi1> to vector<8x1xi1>
    %202 = vector.broadcast %201 : vector<8x1xi1> to vector<8x64xi1>
    %203 = vector.broadcast %cst_84 : f32 to vector<8x64xf32>
    %204 = arith.select %202, %174, %203 : vector<8x64xi1>, vector<8x64xf32>
    %c0_85 = arith.constant 0 : index
    %c21 = arith.constant 21 : index
    %c0_86 = arith.constant 0 : index
    %205 = vector.load %arg4[%c0_85, %c21, %c0_86] : memref<1x24x128xf32, #tpu.memory_space<vmem>>, vector<1x1x64xf32>
    %206 = vector.shape_cast %205 : vector<1x1x64xf32> to vector<1x64xf32>
    %207 = vector.broadcast %206 : vector<1x64xf32> to vector<8x64xf32>
    %208 = arith.mulf %204, %207 : vector<8x64xf32>
    %209 = arith.addf %193, %208 : vector<8x64xf32>
    %c7_i32 = arith.constant 7 : i32
    %210 = tpu.dynamic_rotate %174 by %c7_i32 dim 0 : vector<8x64xf32>, i32 -> vector<8x64xf32>
    %c1_i32_87 = arith.constant 1 : i32
    %211 = vector.broadcast %c1_i32_87 : i32 to vector<8x1xi32>
    %212 = arith.addi %175, %211 : vector<8x1xi32>
    %c0_i32_88 = arith.constant 0 : i32
    %213 = vector.broadcast %c0_i32_88 : i32 to vector<8x1xi32>
    %214 = arith.cmpi sge, %212, %213 : vector<8x1xi32>
    %c8_i32_89 = arith.constant 8 : i32
    %215 = vector.broadcast %c8_i32_89 : i32 to vector<8x1xi32>
    %216 = arith.cmpi slt, %212, %215 : vector<8x1xi32>
    %217 = arith.andi %214, %216 : vector<8x1xi1>
    %cst_90 = arith.constant 0.000000e+00 : f32
    %218 = vector.shape_cast %217 : vector<8x1xi1> to vector<8x1xi1>
    %219 = vector.broadcast %218 : vector<8x1xi1> to vector<8x64xi1>
    %220 = vector.broadcast %cst_90 : f32 to vector<8x64xf32>
    %221 = arith.select %219, %210, %220 : vector<8x64xi1>, vector<8x64xf32>
    %c0_91 = arith.constant 0 : index
    %c22 = arith.constant 22 : index
    %c0_92 = arith.constant 0 : index
    %222 = vector.load %arg4[%c0_91, %c22, %c0_92] : memref<1x24x128xf32, #tpu.memory_space<vmem>>, vector<1x1x64xf32>
    %223 = vector.shape_cast %222 : vector<1x1x64xf32> to vector<1x64xf32>
    %224 = vector.broadcast %223 : vector<1x64xf32> to vector<8x64xf32>
    %225 = arith.mulf %221, %224 : vector<8x64xf32>
    %226 = arith.addf %209, %225 : vector<8x64xf32>
    %c0_93 = arith.constant 0 : index
    %c12 = arith.constant 12 : index
    %c0_94 = arith.constant 0 : index
    %227 = vector.load %arg4[%c0_93, %c12, %c0_94] : memref<1x24x128xf32, #tpu.memory_space<vmem>>, vector<1x1x64xf32>
    %228 = vector.shape_cast %227 : vector<1x1x64xf32> to vector<1x64xf32>
    %229 = vector.broadcast %228 : vector<1x64xf32> to vector<8x64xf32>
    %230 = arith.addf %226, %229 : vector<8x64xf32>
    %231 = arith.negf %230 : vector<8x64xf32>
    %232 = math.exp %231 : vector<8x64xf32>
    %cst_95 = arith.constant 1.000000e+00 : f32
    %233 = vector.broadcast %cst_95 : f32 to vector<8x64xf32>
    %234 = arith.addf %233, %232 : vector<8x64xf32>
    %235 = arith.divf %233, %234 : vector<8x64xf32>
    %236 = arith.mulf %230, %235 : vector<8x64xf32>
    %237 = arith.truncf %236 : vector<8x64xf32> to vector<8x64xbf16>
    %c0_96 = arith.constant 0 : index
    %c0_97 = arith.constant 0 : index
    %c0_98 = arith.constant 0 : index
    %238 = vector.load %arg11[%c0_96, %c0_97, %c0_98] : memref<1x64x32xbf16, #tpu.memory_space<vmem>>, vector<1x64x32xbf16>
    %239 = vector.shape_cast %238 : vector<1x64x32xbf16> to vector<64x32xbf16>
    %cst_99 = arith.constant dense<0.000000e+00> : vector<8x32xf32>
    %240 = tpu.matmul %237, %239, %cst_99 {dimension_numbers = #tpu.dot_dimension_numbers<[1], [0], [0], [1], [0, 0, 1, 1], [], []>} : vector<8x64xbf16>, vector<64x32xbf16>, vector<8x32xf32> -> vector<8x32xf32>
    %c0_100 = arith.constant 0 : index
    %c13 = arith.constant 13 : index
    %c0_101 = arith.constant 0 : index
    %241 = vector.load %arg4[%c0_100, %c13, %c0_101] : memref<1x24x128xf32, #tpu.memory_space<vmem>>, vector<1x1x32xf32>
    %242 = vector.shape_cast %241 : vector<1x1x32xf32> to vector<1x32xf32>
    %243 = vector.broadcast %242 : vector<1x32xf32> to vector<8x32xf32>
    %244 = arith.addf %240, %243 : vector<8x32xf32>
    %245 = arith.addf %127, %244 : vector<8x32xf32>
    %c0_102 = arith.constant 0 : index
    %c14 = arith.constant 14 : index
    %c0_103 = arith.constant 0 : index
    %246 = vector.load %arg4[%c0_102, %c14, %c0_103] : memref<1x24x128xf32, #tpu.memory_space<vmem>>, vector<1x1x32xf32>
    %247 = vector.shape_cast %246 : vector<1x1x32xf32> to vector<1x32xf32>
    %c0_104 = arith.constant 0 : index
    %c15 = arith.constant 15 : index
    %c0_105 = arith.constant 0 : index
    %248 = vector.load %arg4[%c0_104, %c15, %c0_105] : memref<1x24x128xf32, #tpu.memory_space<vmem>>, vector<1x1x32xf32>
    %249 = vector.shape_cast %248 : vector<1x1x32xf32> to vector<1x32xf32>
    %cst_106 = arith.constant dense<0.000000e+00> : vector<8xf32>
    %250 = vector.multi_reduction <add>, %245, %cst_106 [1] : vector<8x32xf32> to vector<8xf32>
    %251 = vector.shape_cast %250 : vector<8xf32> to vector<8x1xf32>
    %cst_107 = arith.constant 3.200000e+01 : f32
    %252 = vector.broadcast %cst_107 : f32 to vector<8x1xf32>
    %253 = arith.divf %251, %252 : vector<8x1xf32>
    %254 = vector.broadcast %253 : vector<8x1xf32> to vector<8x32xf32>
    %255 = arith.subf %245, %254 : vector<8x32xf32>
    %256 = arith.mulf %255, %255 : vector<8x32xf32>
    %cst_108 = arith.constant dense<0.000000e+00> : vector<8xf32>
    %257 = vector.multi_reduction <add>, %256, %cst_108 [1] : vector<8x32xf32> to vector<8xf32>
    %258 = vector.shape_cast %257 : vector<8xf32> to vector<8x1xf32>
    %cst_109 = arith.constant 3.200000e+01 : f32
    %259 = vector.broadcast %cst_109 : f32 to vector<8x1xf32>
    %260 = arith.divf %258, %259 : vector<8x1xf32>
    %261 = vector.broadcast %253 : vector<8x1xf32> to vector<8x32xf32>
    %262 = arith.subf %245, %261 : vector<8x32xf32>
    %cst_110 = arith.constant 9.99999974E-6 : f32
    %263 = vector.broadcast %cst_110 : f32 to vector<8x1xf32>
    %264 = arith.addf %260, %263 : vector<8x1xf32>
    %265 = math.rsqrt %264 : vector<8x1xf32>
    %266 = vector.broadcast %265 : vector<8x1xf32> to vector<8x32xf32>
    %267 = arith.mulf %262, %266 : vector<8x32xf32>
    %268 = vector.broadcast %247 : vector<1x32xf32> to vector<8x32xf32>
    %269 = arith.mulf %267, %268 : vector<8x32xf32>
    %270 = vector.broadcast %249 : vector<1x32xf32> to vector<8x32xf32>
    %271 = arith.addf %269, %270 : vector<8x32xf32>
    %272 = arith.truncf %271 : vector<8x32xf32> to vector<8x32xbf16>
    %c0_111 = arith.constant 0 : index
    %c0_112 = arith.constant 0 : index
    %c0_113 = arith.constant 0 : index
    %273 = vector.load %arg12[%c0_111, %c0_112, %c0_113] : memref<1x32x64xbf16, #tpu.memory_space<vmem>>, vector<1x32x64xbf16>
    %274 = vector.shape_cast %273 : vector<1x32x64xbf16> to vector<32x64xbf16>
    %cst_114 = arith.constant dense<0.000000e+00> : vector<8x64xf32>
    %275 = tpu.matmul %272, %274, %cst_114 {dimension_numbers = #tpu.dot_dimension_numbers<[1], [0], [0], [1], [0, 0, 1, 1], [], []>} : vector<8x32xbf16>, vector<32x64xbf16>, vector<8x64xf32> -> vector<8x64xf32>
    %c0_115 = arith.constant 0 : index
    %c16 = arith.constant 16 : index
    %c0_116 = arith.constant 0 : index
    %276 = vector.load %arg4[%c0_115, %c16, %c0_116] : memref<1x24x128xf32, #tpu.memory_space<vmem>>, vector<1x1x64xf32>
    %277 = vector.shape_cast %276 : vector<1x1x64xf32> to vector<1x64xf32>
    %278 = vector.broadcast %277 : vector<1x64xf32> to vector<8x64xf32>
    %279 = arith.addf %275, %278 : vector<8x64xf32>
    %280 = arith.negf %279 : vector<8x64xf32>
    %281 = math.exp %280 : vector<8x64xf32>
    %cst_117 = arith.constant 1.000000e+00 : f32
    %282 = vector.broadcast %cst_117 : f32 to vector<8x64xf32>
    %283 = arith.addf %282, %281 : vector<8x64xf32>
    %284 = arith.divf %282, %283 : vector<8x64xf32>
    %285 = arith.mulf %279, %284 : vector<8x64xf32>
    %286 = arith.truncf %285 : vector<8x64xf32> to vector<8x64xbf16>
    %c0_118 = arith.constant 0 : index
    %c0_119 = arith.constant 0 : index
    %c0_120 = arith.constant 0 : index
    %287 = vector.load %arg13[%c0_118, %c0_119, %c0_120] : memref<1x64x32xbf16, #tpu.memory_space<vmem>>, vector<1x64x32xbf16>
    %288 = vector.shape_cast %287 : vector<1x64x32xbf16> to vector<64x32xbf16>
    %cst_121 = arith.constant dense<0.000000e+00> : vector<8x32xf32>
    %289 = tpu.matmul %286, %288, %cst_121 {dimension_numbers = #tpu.dot_dimension_numbers<[1], [0], [0], [1], [0, 0, 1, 1], [], []>} : vector<8x64xbf16>, vector<64x32xbf16>, vector<8x32xf32> -> vector<8x32xf32>
    %c0_122 = arith.constant 0 : index
    %c17 = arith.constant 17 : index
    %c0_123 = arith.constant 0 : index
    %290 = vector.load %arg4[%c0_122, %c17, %c0_123] : memref<1x24x128xf32, #tpu.memory_space<vmem>>, vector<1x1x32xf32>
    %291 = vector.shape_cast %290 : vector<1x1x32xf32> to vector<1x32xf32>
    %292 = vector.broadcast %291 : vector<1x32xf32> to vector<8x32xf32>
    %293 = arith.addf %289, %292 : vector<8x32xf32>
    %cst_124 = arith.constant 5.000000e-01 : f32
    %294 = vector.broadcast %cst_124 : f32 to vector<8x32xf32>
    %295 = arith.mulf %294, %293 : vector<8x32xf32>
    %296 = arith.addf %245, %295 : vector<8x32xf32>
    %c0_125 = arith.constant 0 : index
    %c18 = arith.constant 18 : index
    %c0_126 = arith.constant 0 : index
    %297 = vector.load %arg4[%c0_125, %c18, %c0_126] : memref<1x24x128xf32, #tpu.memory_space<vmem>>, vector<1x1x32xf32>
    %298 = vector.shape_cast %297 : vector<1x1x32xf32> to vector<1x32xf32>
    %c0_127 = arith.constant 0 : index
    %c19 = arith.constant 19 : index
    %c0_128 = arith.constant 0 : index
    %299 = vector.load %arg4[%c0_127, %c19, %c0_128] : memref<1x24x128xf32, #tpu.memory_space<vmem>>, vector<1x1x32xf32>
    %300 = vector.shape_cast %299 : vector<1x1x32xf32> to vector<1x32xf32>
    %cst_129 = arith.constant dense<0.000000e+00> : vector<8xf32>
    %301 = vector.multi_reduction <add>, %296, %cst_129 [1] : vector<8x32xf32> to vector<8xf32>
    %302 = vector.shape_cast %301 : vector<8xf32> to vector<8x1xf32>
    %cst_130 = arith.constant 3.200000e+01 : f32
    %303 = vector.broadcast %cst_130 : f32 to vector<8x1xf32>
    %304 = arith.divf %302, %303 : vector<8x1xf32>
    %305 = vector.broadcast %304 : vector<8x1xf32> to vector<8x32xf32>
    %306 = arith.subf %296, %305 : vector<8x32xf32>
    %307 = arith.mulf %306, %306 : vector<8x32xf32>
    %cst_131 = arith.constant dense<0.000000e+00> : vector<8xf32>
    %308 = vector.multi_reduction <add>, %307, %cst_131 [1] : vector<8x32xf32> to vector<8xf32>
    %309 = vector.shape_cast %308 : vector<8xf32> to vector<8x1xf32>
    %cst_132 = arith.constant 3.200000e+01 : f32
    %310 = vector.broadcast %cst_132 : f32 to vector<8x1xf32>
    %311 = arith.divf %309, %310 : vector<8x1xf32>
    %312 = vector.broadcast %304 : vector<8x1xf32> to vector<8x32xf32>
    %313 = arith.subf %296, %312 : vector<8x32xf32>
    %cst_133 = arith.constant 9.99999974E-6 : f32
    %314 = vector.broadcast %cst_133 : f32 to vector<8x1xf32>
    %315 = arith.addf %311, %314 : vector<8x1xf32>
    %316 = math.rsqrt %315 : vector<8x1xf32>
    %317 = vector.broadcast %316 : vector<8x1xf32> to vector<8x32xf32>
    %318 = arith.mulf %313, %317 : vector<8x32xf32>
    %319 = vector.broadcast %298 : vector<1x32xf32> to vector<8x32xf32>
    %320 = arith.mulf %318, %319 : vector<8x32xf32>
    %321 = vector.broadcast %300 : vector<1x32xf32> to vector<8x32xf32>
    %322 = arith.addf %320, %321 : vector<8x32xf32>
    %c0_134 = arith.constant 0 : index
    %c0_135 = arith.constant 0 : index
    %c0_136 = arith.constant 0 : index
    %323 = vector.load %arg14[%c0_134, %c0_135, %c0_136] : memref<1x8x32xf32, #tpu.memory_space<vmem>>, vector<1x8x32xf32>
    %324 = vector.shape_cast %323 : vector<1x8x32xf32> to vector<8x32xf32>
    %325 = vector.shape_cast %322 : vector<8x32xf32> to vector<1x8x32xf32>
    tpu.vector_store %arg14[%c0_134, %c0_135, %c0_136], %325 {strides = array<i32>} : memref<1x8x32xf32, #tpu.memory_space<vmem>>, vector<1x8x32xf32>,
    return
  }
  func.func @transform_0(%arg0: i32, %arg1: i32) -> (i32, i32, i32) {
    %c0_i32 = arith.constant 0 : i32
    %c0_i32_0 = arith.constant 0 : i32
    %c0_i32_1 = arith.constant 0 : i32
    return %arg0, %c0_i32, %c0_i32_0 : i32, i32, i32
  }
  func.func @transform_1(%arg0: i32, %arg1: i32) -> (i32, i32, i32) {
    %c0_i32 = arith.constant 0 : i32
    %c0_i32_0 = arith.constant 0 : i32
    %c0_i32_1 = arith.constant 0 : i32
    return %arg0, %c0_i32, %c0_i32_0 : i32, i32, i32
  }
  func.func @transform_2(%arg0: i32, %arg1: i32) -> (i32, i32, i32) {
    %c0_i32 = arith.constant 0 : i32
    %c0_i32_0 = arith.constant 0 : i32
    %c0_i32_1 = arith.constant 0 : i32
    return %arg1, %c0_i32, %c0_i32_0 : i32, i32, i32
  }
  func.func @transform_3(%arg0: i32, %arg1: i32) -> (i32, i32, i32) {
    %c0_i32 = arith.constant 0 : i32
    %c0_i32_0 = arith.constant 0 : i32
    %c0_i32_1 = arith.constant 0 : i32
    return %arg1, %c0_i32, %c0_i32_0 : i32, i32, i32
  }
  func.func @transform_4(%arg0: i32, %arg1: i32) -> (i32, i32, i32) {
    %c0_i32 = arith.constant 0 : i32
    %c0_i32_0 = arith.constant 0 : i32
    %c0_i32_1 = arith.constant 0 : i32
    return %arg1, %c0_i32, %c0_i32_0 : i32, i32, i32
  }
  func.func @transform_5(%arg0: i32, %arg1: i32) -> (i32, i32, i32) {
    %c0_i32 = arith.constant 0 : i32
    %c0_i32_0 = arith.constant 0 : i32
    %c0_i32_1 = arith.constant 0 : i32
    return %arg1, %c0_i32, %c0_i32_0 : i32, i32, i32
  }
  func.func @transform_6(%arg0: i32, %arg1: i32) -> (i32, i32, i32) {
    %c0_i32 = arith.constant 0 : i32
    %c0_i32_0 = arith.constant 0 : i32
    %c0_i32_1 = arith.constant 0 : i32
    return %arg1, %c0_i32, %c0_i32_0 : i32, i32, i32
  }
  func.func @transform_7(%arg0: i32, %arg1: i32) -> (i32, i32, i32) {
    %c0_i32 = arith.constant 0 : i32
    %c0_i32_0 = arith.constant 0 : i32
    %c0_i32_1 = arith.constant 0 : i32
    return %arg1, %c0_i32, %c0_i32_0 : i32, i32, i32
  }
  func.func @transform_8(%arg0: i32, %arg1: i32) -> (i32, i32, i32) {
    %c0_i32 = arith.constant 0 : i32
    %c0_i32_0 = arith.constant 0 : i32
    %c0_i32_1 = arith.constant 0 : i32
    return %arg1, %c0_i32, %c0_i32_0 : i32, i32, i32
  }
  func.func @transform_9(%arg0: i32, %arg1: i32) -> (i32, i32, i32) {
    %c0_i32 = arith.constant 0 : i32
    %c0_i32_0 = arith.constant 0 : i32
    %c0_i32_1 = arith.constant 0 : i32
    return %arg1, %c0_i32, %c0_i32_0 : i32, i32, i32
  }
  func.func @transform_10(%arg0: i32, %arg1: i32) -> (i32, i32, i32) {
    %c0_i32 = arith.constant 0 : i32
    %c0_i32_0 = arith.constant 0 : i32
    %c0_i32_1 = arith.constant 0 : i32
    return %arg1, %c0_i32, %c0_i32_0 : i32, i32, i32
  }
  func.func @transform_11(%arg0: i32, %arg1: i32) -> (i32, i32, i32) {
    %c0_i32 = arith.constant 0 : i32
    %c0_i32_0 = arith.constant 0 : i32
    %c0_i32_1 = arith.constant 0 : i32
    return %arg1, %c0_i32, %c0_i32_0 : i32, i32, i32
  }
  func.func @transform_12(%arg0: i32, %arg1: i32) -> (i32, i32, i32) {
    %c0_i32 = arith.constant 0 : i32
    %c0_i32_0 = arith.constant 0 : i32
    %c0_i32_1 = arith.constant 0 : i32
    return %arg0, %c0_i32, %c0_i32_0 : i32, i32, i32
  }
}

</mosaic_0001>

<llo_original>
// kernel: encoder_forward.1
$region0: #{encoder_forward.1}
  #allocation0 [shape = 'u32[]', space=smem, size = 0x4, offset = 0x4, fixed_abs, tag = 'smem constant byte address 0x4 - core index']
  #allocation1 [shape = 'u32[72,128]{1,0:T(1,128)}', space=vmem, size = 0x9000, scoped, tag = 'internal scratch']
  %s0 = inlined_call_operand.vmem [shape: f32[2,8,32], index: 0, kind: input, shape index: {}]
  %s1 = inlined_call_operand.vmem [shape: f32[2,1,8], index: 1, kind: input, shape index: {}]
  %s2 = inlined_call_operand.vmem [shape: f32[2,24,128], index: 2, kind: input, shape index: {}]
  %s3 = inlined_call_operand.vmem [shape: bf16[2,32,64], index: 3, kind: input, shape index: {}]
  %s4 = inlined_call_operand.vmem [shape: bf16[2,64,32], index: 4, kind: input, shape index: {}]
  %s5 = inlined_call_operand.vmem [shape: bf16[2,32,96], index: 5, kind: input, shape index: {}]
  %s6 = inlined_call_operand.vmem [shape: bf16[2,32,32], index: 6, kind: input, shape index: {}]
  %s7 = inlined_call_operand.vmem [shape: bf16[2,32,64], index: 7, kind: input, shape index: {}]
  %s8 = inlined_call_operand.vmem [shape: bf16[2,32,64], index: 8, kind: input, shape index: {}]
  %s9 = inlined_call_operand.vmem [shape: bf16[2,64,32], index: 9, kind: input, shape index: {}]
  %s10 = inlined_call_operand.vmem [shape: bf16[2,32,64], index: 10, kind: input, shape index: {}]
  %s11 = inlined_call_operand.vmem [shape: bf16[2,64,32], index: 11, kind: input, shape index: {}]
  %s12 = inlined_call_operand.hbm [shape: f32[2,8,32], index: 12, kind: output, shape index: {}]
  %s13 = sld [smem:[#allocation0]]
  $region85: #{encoder_forward.1} parent=0
    _
  %s15 = ssub.s32 1, %s13
  %s16 = scalar_select 0, %s15, %s13
  $region1: #{encoder_forward.1} parent=0
    #allocation2 [shape = 'u8[8192]{0}', space=vmem, size = 0x2000, scoped, tag = 'output window, operand 0']
    #allocation3 [shape = 's32[2]{0}', space=sflag, size = 0x8, scoped, tag = 'scoped memory for encoder_forward.1']
    %17 = vsyncpa [#allocation3], 0
    %s18 = scalar_lea.sflag [#allocation3], 1
    %19 = vsyncpa %s18, 0
    loop: start=0, step=1, limit=6
    $region2: #{encoder_forward.1} parent=1 // loop_pre_header
      _
    $region3: #{encoder_forward.1} parent=1 // loop_header
      %s21 = sphi 0, %s25
      %p22 = scmp.ge.s32.totalorder %s21, 6
      %s28 = sphi 0, %s40
      %s29 = sphi 0, %s36
      %s30 = sphi 0, %s28
      %s31 = sphi 0, %s29
      %s32 = sphi 0, %s30
      %s33 = sphi 0, %s31
      %s43 = sphi 0, %s45
      %s46 = sphi 0, %s43
      %s47 = sphi 0, %s46
      %s63 = sphi 0, %s47
      %s69 = sphi 0, %s71
      %s72 = sphi 0, %s69
      %s73 = sphi 0, %s72
      %s89 = sphi 0, %s73
      %s95 = sphi 0, %s97
      %s98 = sphi 0, %s95
      %s99 = sphi 0, %s98
      %s115 = sphi 0, %s99
      %s121 = sphi 0, %s123
      %s124 = sphi 0, %s121
      %s125 = sphi 0, %s124
      %s141 = sphi 0, %s125
      %s147 = sphi 0, %s149
      %s150 = sphi 0, %s147
      %s151 = sphi 0, %s150
      %s167 = sphi 0, %s151
      %s173 = sphi 0, %s175
      %s176 = sphi 0, %s173
      %s177 = sphi 0, %s176
      %s193 = sphi 0, %s177
      %s199 = sphi 0, %s201
      %s202 = sphi 0, %s199
      %s203 = sphi 0, %s202
      %s219 = sphi 0, %s203
      %s225 = sphi 0, %s227
      %s228 = sphi 0, %s225
      %s229 = sphi 0, %s228
      %s245 = sphi 0, %s229
      %s251 = sphi 0, %s253
      %s254 = sphi 0, %s251
      %s255 = sphi 0, %s254
      %s271 = sphi 0, %s255
      %s277 = sphi 0, %s279
      %s280 = sphi 0, %s277
      %s281 = sphi 0, %s280
      %s297 = sphi 0, %s281
      %s303 = sphi 0, %s305
      %s306 = sphi 0, %s303
      %s307 = sphi 0, %s306
      %s323 = sphi 0, %s307
      %s329 = sphi 0, %s331
      %s332 = sphi 0, %s329
      %s333 = sphi 0, %s332
      %s349 = sphi 0, %s333
      %s355 = sphi 0, %s357
      %s358 = sphi 0, %s355
      %s359 = sphi 0, %s358
      %s375 = sphi 0, %s359
    $region4: #{encoder_forward.1} parent=1 // loop_header_branch
      %24 = sbr.rel (%p22) target = $region8
    $region5: #{encoder_forward.1} parent=1 // loop_body
      %s26 = ssub.s32 %s21, 1
      %s27 = ssub.s32 %s21, 2
      %s34 = sadd.s32 1, %s29
      %p35 = scmp.ge.s32.totalorder %s34, 2
      %s36 = scalar_select %p35, 0, %s34
      %s37 = sadd.s32 1, %s28
      %s38 = scalar_select %p35, %s37, %s28
      %p39 = scmp.ge.s32.totalorder %s38, 2
      %s40 = scalar_select %p39, 0, %s38
      %s41 = ssub.s32 %s28, %s40
      %p42 = scmp.eq.s32.totalorder %s41, 0
      %s44 = sadd.s32 %s43, 1
      %s45 = scalar_select %p42, %s43, %s44
      %p48 = pneg %p42
      %p49 = scmp.eq.s32.totalorder %s21, 3
      %p50 = por %p48, %p49
      %p51 = scmp.ne.s32.totalorder %s43, %s46
      %p52 = scmp.eq.s32.totalorder %s21, 0
      %p53 = por %p51, %p52
      %p54 = scmp.ne.s32.totalorder %s43, %s46
      %p55 = scmp.eq.s32.totalorder %s26, 3
      %p56 = por %p54, %p55
      %p57 = scmp.ne.s32.totalorder %s46, %s47
      %p58 = scmp.eq.s32.totalorder %s26, 0
      %p59 = por %p57, %p58
      %p60 = scmp.ne.s32.totalorder %s46, %s47
      %p61 = scmp.eq.s32.totalorder %s27, 3
      %p62 = por %p60, %p61
      %p64 = scmp.ne.s32.totalorder %s47, %s63
      %p65 = scmp.eq.s32.totalorder %s27, 0
      %p66 = por %p64, %p65
      %s67 = ssub.s32 %s28, %s40
      %p68 = scmp.eq.s32.totalorder %s67, 0
      %s70 = sadd.s32 %s69, 1
      %s71 = scalar_select %p68, %s69, %s70
      %p74 = pneg %p68
      %p75 = scmp.eq.s32.totalorder %s21, 3
      %p76 = por %p74, %p75
      %p77 = scmp.ne.s32.totalorder %s69, %s72
      %p78 = scmp.eq.s32.totalorder %s21, 0
      %p79 = por %p77, %p78
      %p80 = scmp.ne.s32.totalorder %s69, %s72
      %p81 = scmp.eq.s32.totalorder %s26, 3
      %p82 = por %p80, %p81
      %p83 = scmp.ne.s32.totalorder %s72, %s73
      %p84 = scmp.eq.s32.totalorder %s26, 0
      %p85 = por %p83, %p84
      %p86 = scmp.ne.s32.totalorder %s72, %s73
      %p87 = scmp.eq.s32.totalorder %s27, 3
      %p88 = por %p86, %p87
      %p90 = scmp.ne.s32.totalorder %s73, %s89
      %p91 = scmp.eq.s32.totalorder %s27, 0
      %p92 = por %p90, %p91
      %s93 = ssub.s32 %s29, %s36
      %p94 = scmp.eq.s32.totalorder %s93, 0
      %s96 = sadd.s32 %s95, 1
      %s97 = scalar_select %p94, %s95, %s96
      %p100 = pneg %p94
      %p101 = scmp.eq.s32.totalorder %s21, 3
      %p102 = por %p100, %p101
      %p103 = scmp.ne.s32.totalorder %s95, %s98
      %p104 = scmp.eq.s32.totalorder %s21, 0
      %p105 = por %p103, %p104
      %p106 = scmp.ne.s32.totalorder %s95, %s98
      %p107 = scmp.eq.s32.totalorder %s26, 3
      %p108 = por %p106, %p107
      %p109 = scmp.ne.s32.totalorder %s98, %s99
      %p110 = scmp.eq.s32.totalorder %s26, 0
      %p111 = por %p109, %p110
      %p112 = scmp.ne.s32.totalorder %s98, %s99
      %p113 = scmp.eq.s32.totalorder %s27, 3
      %p114 = por %p112, %p113
      %p116 = scmp.ne.s32.totalorder %s99, %s115
      %p117 = scmp.eq.s32.totalorder %s27, 0
      %p118 = por %p116, %p117
      %s119 = ssub.s32 %s29, %s36
      %p120 = scmp.eq.s32.totalorder %s119, 0
      %s122 = sadd.s32 %s121, 1
      %s123 = scalar_select %p120, %s121, %s122
      %p126 = pneg %p120
      %p127 = scmp.eq.s32.totalorder %s21, 3
      %p128 = por %p126, %p127
      %p129 = scmp.ne.s32.totalorder %s121, %s124
      %p130 = scmp.eq.s32.totalorder %s21, 0
      %p131 = por %p129, %p130
      %p132 = scmp.ne.s32.totalorder %s121, %s124
      %p133 = scmp.eq.s32.totalorder %s26, 3
      %p134 = por %p132, %p133
      %p135 = scmp.ne.s32.totalorder %s124, %s125
      %p136 = scmp.eq.s32.totalorder %s26, 0
      %p137 = por %p135, %p136
      %p138 = scmp.ne.s32.totalorder %s124, %s125
      %p139 = scmp.eq.s32.totalorder %s27, 3
      %p140 = por %p138, %p139
      %p142 = scmp.ne.s32.totalorder %s125, %s141
      %p143 = scmp.eq.s32.totalorder %s27, 0
      %p144 = por %p142, %p143
      %s145 = ssub.s32 %s29, %s36
      %p146 = scmp.eq.s32.totalorder %s145, 0
      %s148 = sadd.s32 %s147, 1
      %s149 = scalar_select %p146, %s147, %s148
      %p152 = pneg %p146
      %p153 = scmp.eq.s32.totalorder %s21, 3
      %p154 = por %p152, %p153
      %p155 = scmp.ne.s32.totalorder %s147, %s150
      %p156 = scmp.eq.s32.totalorder %s21, 0
      %p157 = por %p155, %p156
      %p158 = scmp.ne.s32.totalorder %s147, %s150
      %p159 = scmp.eq.s32.totalorder %s26, 3
      %p160 = por %p158, %p159
      %p161 = scmp.ne.s32.totalorder %s150, %s151
      %p162 = scmp.eq.s32.totalorder %s26, 0
      %p163 = por %p161, %p162
      %p164 = scmp.ne.s32.totalorder %s150, %s151
      %p165 = scmp.eq.s32.totalorder %s27, 3
      %p166 = por %p164, %p165
      %p168 = scmp.ne.s32.totalorder %s151, %s167
      %p169 = scmp.eq.s32.totalorder %s27, 0
      %p170 = por %p168, %p169
      %s171 = ssub.s32 %s29, %s36
      %p172 = scmp.eq.s32.totalorder %s171, 0
      %s174 = sadd.s32 %s173, 1
      %s175 = scalar_select %p172, %s173, %s174
      %p178 = pneg %p172
      %p179 = scmp.eq.s32.totalorder %s21, 3
      %p180 = por %p178, %p179
      %p181 = scmp.ne.s32.totalorder %s173, %s176
      %p182 = scmp.eq.s32.totalorder %s21, 0
      %p183 = por %p181, %p182
      %p184 = scmp.ne.s32.totalorder %s173, %s176
      %p185 = scmp.eq.s32.totalorder %s26, 3
      %p186 = por %p184, %p185
      %p187 = scmp.ne.s32.totalorder %s176, %s177
      %p188 = scmp.eq.s32.totalorder %s26, 0
      %p189 = por %p187, %p188
      %p190 = scmp.ne.s32.totalorder %s176, %s177
      %p191 = scmp.eq.s32.totalorder %s27, 3
      %p192 = por %p190, %p191
      %p194 = scmp.ne.s32.totalorder %s177, %s193
      %p195 = scmp.eq.s32.totalorder %s27, 0
      %p196 = por %p194, %p195
      %s197 = ssub.s32 %s29, %s36
      %p198 = scmp.eq.s32.totalorder %s197, 0
      %s200 = sadd.s32 %s199, 1
      %s201 = scalar_select %p198, %s199, %s200
      %p204 = pneg %p198
      %p205 = scmp.eq.s32.totalorder %s21, 3
      %p206 = por %p204, %p205
      %p207 = scmp.ne.s32.totalorder %s199, %s202
      %p208 = scmp.eq.s32.totalorder %s21, 0
      %p209 = por %p207, %p208
      %p210 = scmp.ne.s32.totalorder %s199, %s202
      %p211 = scmp.eq.s32.totalorder %s26, 3
      %p212 = por %p210, %p211
      %p213 = scmp.ne.s32.totalorder %s202, %s203
      %p214 = scmp.eq.s32.totalorder %s26, 0
      %p215 = por %p213, %p214
      %p216 = scmp.ne.s32.totalorder %s202, %s203
      %p217 = scmp.eq.s32.totalorder %s27, 3
      %p218 = por %p216, %p217
      %p220 = scmp.ne.s32.totalorder %s203, %s219
      %p221 = scmp.eq.s32.totalorder %s27, 0
      %p222 = por %p220, %p221
      %s223 = ssub.s32 %s29, %s36
      %p224 = scmp.eq.s32.totalorder %s223, 0
      %s226 = sadd.s32 %s225, 1
      %s227 = scalar_select %p224, %s225, %s226
      %p230 = pneg %p224
      %p231 = scmp.eq.s32.totalorder %s21, 3
      %p232 = por %p230, %p231
      %p233 = scmp.ne.s32.totalorder %s225, %s228
      %p234 = scmp.eq.s32.totalorder %s21, 0
      %p235 = por %p233, %p234
      %p236 = scmp.ne.s32.totalorder %s225, %s228
      %p237 = scmp.eq.s32.totalorder %s26, 3
      %p238 = por %p236, %p237
      %p239 = scmp.ne.s32.totalorder %s228, %s229
      %p240 = scmp.eq.s32.totalorder %s26, 0
      %p241 = por %p239, %p240
      %p242 = scmp.ne.s32.totalorder %s228, %s229
      %p243 = scmp.eq.s32.totalorder %s27, 3
      %p244 = por %p242, %p243
      %p246 = scmp.ne.s32.totalorder %s229, %s245
      %p247 = scmp.eq.s32.totalorder %s27, 0
      %p248 = por %p246, %p247
      %s249 = ssub.s32 %s29, %s36
      %p250 = scmp.eq.s32.totalorder %s249, 0
      %s252 = sadd.s32 %s251, 1
      %s253 = scalar_select %p250, %s251, %s252
      %p256 = pneg %p250
      %p257 = scmp.eq.s32.totalorder %s21, 3
      %p258 = por %p256, %p257
      %p259 = scmp.ne.s32.totalorder %s251, %s254
      %p260 = scmp.eq.s32.totalorder %s21, 0
      %p261 = por %p259, %p260
      %p262 = scmp.ne.s32.totalorder %s251, %s254
      %p263 = scmp.eq.s32.totalorder %s26, 3
      %p264 = por %p262, %p263
      %p265 = scmp.ne.s32.totalorder %s254, %s255
      %p266 = scmp.eq.s32.totalorder %s26, 0
      %p267 = por %p265, %p266
      %p268 = scmp.ne.s32.totalorder %s254, %s255
      %p269 = scmp.eq.s32.totalorder %s27, 3
      %p270 = por %p268, %p269
      %p272 = scmp.ne.s32.totalorder %s255, %s271
      %p273 = scmp.eq.s32.totalorder %s27, 0
      %p274 = por %p272, %p273
      %s275 = ssub.s32 %s29, %s36
      %p276 = scmp.eq.s32.totalorder %s275, 0
      %s278 = sadd.s32 %s277, 1
      %s279 = scalar_select %p276, %s277, %s278
      %p282 = pneg %p276
      %p283 = scmp.eq.s32.totalorder %s21, 3
      %p284 = por %p282, %p283
      %p285 = scmp.ne.s32.totalorder %s277, %s280
      %p286 = scmp.eq.s32.totalorder %s21, 0
      %p287 = por %p285, %p286
      %p288 = scmp.ne.s32.totalorder %s277, %s280
      %p289 = scmp.eq.s32.totalorder %s26, 3
      %p290 = por %p288, %p289
      %p291 = scmp.ne.s32.totalorder %s280, %s281
      %p292 = scmp.eq.s32.totalorder %s26, 0
      %p293 = por %p291, %p292
      %p294 = scmp.ne.s32.totalorder %s280, %s281
      %p295 = scmp.eq.s32.totalorder %s27, 3
      %p296 = por %p294, %p295
      %p298 = scmp.ne.s32.totalorder %s281, %s297
      %p299 = scmp.eq.s32.totalorder %s27, 0
      %p300 = por %p298, %p299
      %s301 = ssub.s32 %s29, %s36
      %p302 = scmp.eq.s32.totalorder %s301, 0
      %s304 = sadd.s32 %s303, 1
      %s305 = scalar_select %p302, %s303, %s304
      %p308 = pneg %p302
      %p309 = scmp.eq.s32.totalorder %s21, 3
      %p310 = por %p308, %p309
      %p311 = scmp.ne.s32.totalorder %s303, %s306
      %p312 = scmp.eq.s32.totalorder %s21, 0
      %p313 = por %p311, %p312
      %p314 = scmp.ne.s32.totalorder %s303, %s306
      %p315 = scmp.eq.s32.totalorder %s26, 3
      %p316 = por %p314, %p315
      %p317 = scmp.ne.s32.totalorder %s306, %s307
      %p318 = scmp.eq.s32.totalorder %s26, 0
      %p319 = por %p317, %p318
      %p320 = scmp.ne.s32.totalorder %s306, %s307
      %p321 = scmp.eq.s32.totalorder %s27, 3
      %p322 = por %p320, %p321
      %p324 = scmp.ne.s32.totalorder %s307, %s323
      %p325 = scmp.eq.s32.totalorder %s27, 0
      %p326 = por %p324, %p325
      %s327 = ssub.s32 %s29, %s36
      %p328 = scmp.eq.s32.totalorder %s327, 0
      %s330 = sadd.s32 %s329, 1
      %s331 = scalar_select %p328, %s329, %s330
      %p334 = pneg %p328
      %p335 = scmp.eq.s32.totalorder %s21, 3
      %p336 = por %p334, %p335
      %p337 = scmp.ne.s32.totalorder %s329, %s332
      %p338 = scmp.eq.s32.totalorder %s21, 0
      %p339 = por %p337, %p338
      %p340 = scmp.ne.s32.totalorder %s329, %s332
      %p341 = scmp.eq.s32.totalorder %s26, 3
      %p342 = por %p340, %p341
      %p343 = scmp.ne.s32.totalorder %s332, %s333
      %p344 = scmp.eq.s32.totalorder %s26, 0
      %p345 = por %p343, %p344
      %p346 = scmp.ne.s32.totalorder %s332, %s333
      %p347 = scmp.eq.s32.totalorder %s27, 3
      %p348 = por %p346, %p347
      %p350 = scmp.ne.s32.totalorder %s333, %s349
      %p351 = scmp.eq.s32.totalorder %s27, 0
      %p352 = por %p350, %p351
      %s353 = ssub.s32 %s28, %s40
      %p354 = scmp.eq.s32.totalorder %s353, 0
      %s356 = sadd.s32 %s355, 1
      %s357 = scalar_select %p354, %s355, %s356
      %p360 = pneg %p354
      %p361 = scmp.eq.s32.totalorder %s21, 3
      %p362 = por %p360, %p361
      %p363 = scmp.ne.s32.totalorder %s355, %s358
      %p364 = scmp.eq.s32.totalorder %s21, 0
      %p365 = por %p363, %p364
      %p366 = scmp.ne.s32.totalorder %s355, %s358
      %p367 = scmp.eq.s32.totalorder %s26, 3
      %p368 = por %p366, %p367
      %p369 = scmp.ne.s32.totalorder %s358, %s359
      %p370 = scmp.eq.s32.totalorder %s26, 0
      %p371 = por %p369, %p370
      %p372 = scmp.ne.s32.totalorder %s358, %s359
      %p373 = scmp.eq.s32.totalorder %s27, 3
      %p374 = por %p372, %p373
      %p376 = scmp.ne.s32.totalorder %s359, %s375
      %p377 = scmp.eq.s32.totalorder %s27, 0
      %p378 = por %p376, %p377
      %p379 = scmp.le.s32.totalorder 1, %s21
      %p380 = scmp.lt.s32.totalorder %s21, 5
      %p381 = pnand %p379, %p380
      %p382 = pneg %p381
      // Predicated region
      $region9: #{encoder_forward.1} parent=5 // pred_check
        _
      $region10: #{encoder_forward.1} parent=5 // pred_check_branch
        %384 = sbr.rel (%p381) target = $region12
      $region11: #{encoder_forward.1} parent=5 // pred_region
        %s385 = ssub.s32 %s21, 1
      $region12: #{encoder_forward.1} parent=5 // pred_fallthru
        _
      %p386 = scmp.lt.s32.totalorder %s21, 4
      // Predicated region
      $region13: #{encoder_forward.1} parent=5 // pred_check
        %p387 = pneg %p386
      $region14: #{encoder_forward.1} parent=5 // pred_check_branch
        %389 = sbr.rel (%p387) target = $region16
      $region15: #{encoder_forward.1} parent=5 // pred_region
        // Predicated region
        $region17: #{encoder_forward.1} parent=15 // pred_check
          %p390 = pneg %p53
        $region18: #{encoder_forward.1} parent=15 // pred_check_branch
          %392 = sbr.rel (%p390) target = $region20
        $region19: #{encoder_forward.1} parent=15 // pred_region
          %p393 = scmp.lt.s32.totalorder %s28, 1
          %s394 = scalar_select %p393, %s28, 1
          %s395 = smul.addr %s394, 8
          %s396 = scalar_lea.vmem %s0, %s395
        $region20: #{encoder_forward.1} parent=15 // pred_fallthru
          _
        // Predicated region
        $region21: #{encoder_forward.1} parent=15 // pred_check
          %p397 = pneg %p79
        $region22: #{encoder_forward.1} parent=15 // pred_check_branch
          %399 = sbr.rel (%p397) target = $region24
        $region23: #{encoder_forward.1} parent=15 // pred_region
          %p400 = scmp.lt.s32.totalorder %s28, 1
          %s401 = scalar_select %p400, %s28, 1
          %s402 = scalar_lea.vmem %s1, %s401
        $region24: #{encoder_forward.1} parent=15 // pred_fallthru
          _
        // Predicated region
        $region25: #{encoder_forward.1} parent=15 // pred_check
          %p403 = pneg %p105
        $region26: #{encoder_forward.1} parent=15 // pred_check_branch
          %405 = sbr.rel (%p403) target = $region28
        $region27: #{encoder_forward.1} parent=15 // pred_region
          %p406 = scmp.lt.s32.totalorder %s29, 1
          %s407 = scalar_select %p406, %s29, 1
          %s408 = smul.addr %s407, 3
          %s409 = smul.addr %s408, 8
          %s410 = scalar_lea.vmem %s2, %s409
        $region28: #{encoder_forward.1} parent=15 // pred_fallthru
          _
        // Predicated region
        $region29: #{encoder_forward.1} parent=15 // pred_check
          %p411 = pneg %p131
        $region30: #{encoder_forward.1} parent=15 // pred_check_branch
          %413 = sbr.rel (%p411) target = $region32
        $region31: #{encoder_forward.1} parent=15 // pred_region
          %p414 = scmp.lt.s32.totalorder %s29, 1
          %s415 = scalar_select %p414, %s29, 1
          %s416 = smul.addr %s415, 4
          %s417 = smul.addr %s416, 4
          %s418 = scalar_lea.vmem %s3, %s417
        $region32: #{encoder_forward.1} parent=15 // pred_fallthru
          _
        // Predicated region
        $region33: #{encoder_forward.1} parent=15 // pred_check
          %p419 = pneg %p157
        $region34: #{encoder_forward.1} parent=15 // pred_check_branch
          %421 = sbr.rel (%p419) target = $region36
        $region35: #{encoder_forward.1} parent=15 // pred_region
          %p422 = scmp.lt.s32.totalorder %s29, 1
          %s423 = scalar_select %p422, %s29, 1
          %s424 = smul.addr %s423, 8
          %s425 = smul.addr %s424, 4
          %s426 = scalar_lea.vmem %s4, %s425
        $region36: #{encoder_forward.1} parent=15 // pred_fallthru
          _
        // Predicated region
        $region37: #{encoder_forward.1} parent=15 // pred_check
          %p427 = pneg %p183
        $region38: #{encoder_forward.1} parent=15 // pred_check_branch
          %429 = sbr.rel (%p427) target = $region40
        $region39: #{encoder_forward.1} parent=15 // pred_region
          %p430 = scmp.lt.s32.totalorder %s29, 1
          %s431 = scalar_select %p430, %s29, 1
          %s432 = smul.addr %s431, 4
          %s433 = smul.addr %s432, 4
          %s434 = scalar_lea.vmem %s5, %s433
        $region40: #{encoder_forward.1} parent=15 // pred_fallthru
          _
        // Predicated region
        $region41: #{encoder_forward.1} parent=15 // pred_check
          %p435 = pneg %p209
        $region42: #{encoder_forward.1} parent=15 // pred_check_branch
          %437 = sbr.rel (%p435) target = $region44
        $region43: #{encoder_forward.1} parent=15 // pred_region
          %p438 = scmp.lt.s32.totalorder %s29, 1
          %s439 = scalar_select %p438, %s29, 1
          %s440 = smul.addr %s439, 4
          %s441 = smul.addr %s440, 4
          %s442 = scalar_lea.vmem %s6, %s441
        $region44: #{encoder_forward.1} parent=15 // pred_fallthru
          _
        // Predicated region
        $region45: #{encoder_forward.1} parent=15 // pred_check
          %p443 = pneg %p235
        $region46: #{encoder_forward.1} parent=15 // pred_check_branch
          %445 = sbr.rel (%p443) target = $region48
        $region47: #{encoder_forward.1} parent=15 // pred_region
          %p446 = scmp.lt.s32.totalorder %s29, 1
          %s447 = scalar_select %p446, %s29, 1
          %s448 = smul.addr %s447, 4
          %s449 = smul.addr %s448, 4
          %s450 = scalar_lea.vmem %s7, %s449
        $region48: #{encoder_forward.1} parent=15 // pred_fallthru
          _
        // Predicated region
        $region49: #{encoder_forward.1} parent=15 // pred_check
          %p451 = pneg %p261
        $region50: #{encoder_forward.1} parent=15 // pred_check_branch
          %453 = sbr.rel (%p451) target = $region52
        $region51: #{encoder_forward.1} parent=15 // pred_region
          %p454 = scmp.lt.s32.totalorder %s29, 1
          %s455 = scalar_select %p454, %s29, 1
          %s456 = smul.addr %s455, 4
          %s457 = smul.addr %s456, 4
          %s458 = scalar_lea.vmem %s8, %s457
        $region52: #{encoder_forward.1} parent=15 // pred_fallthru
          _
        // Predicated region
        $region53: #{encoder_forward.1} parent=15 // pred_check
          %p459 = pneg %p287
        $region54: #{encoder_forward.1} parent=15 // pred_check_branch
          %461 = sbr.rel (%p459) target = $region56
        $region55: #{encoder_forward.1} parent=15 // pred_region
          %p462 = scmp.lt.s32.totalorder %s29, 1
          %s463 = scalar_select %p462, %s29, 1
          %s464 = smul.addr %s463, 8
          %s465 = smul.addr %s464, 4
          %s466 = scalar_lea.vmem %s9, %s465
        $region56: #{encoder_forward.1} parent=15 // pred_fallthru
          _
        // Predicated region
        $region57: #{encoder_forward.1} parent=15 // pred_check
          %p467 = pneg %p313
        $region58: #{encoder_forward.1} parent=15 // pred_check_branch
          %469 = sbr.rel (%p467) target = $region60
        $region59: #{encoder_forward.1} parent=15 // pred_region
          %p470 = scmp.lt.s32.totalorder %s29, 1
          %s471 = scalar_select %p470, %s29, 1
          %s472 = smul.addr %s471, 4
          %s473 = smul.addr %s472, 4
          %s474 = scalar_lea.vmem %s10, %s473
        $region60: #{encoder_forward.1} parent=15 // pred_fallthru
          _
        // Predicated region
        $region61: #{encoder_forward.1} parent=15 // pred_check
          %p475 = pneg %p339
        $region62: #{encoder_forward.1} parent=15 // pred_check_branch
          %477 = sbr.rel (%p475) target = $region64
        $region63: #{encoder_forward.1} parent=15 // pred_region
          %p478 = scmp.lt.s32.totalorder %s29, 1
          %s479 = scalar_select %p478, %s29, 1
          %s480 = smul.addr %s479, 8
          %s481 = smul.addr %s480, 4
          %s482 = scalar_lea.vmem %s11, %s481
        $region64: #{encoder_forward.1} parent=15 // pred_fallthru
          _
      $region16: #{encoder_forward.1} parent=5 // pred_fallthru
        _
      %p483 = scmp.le.s32.totalorder 1, %s21
      %p484 = scmp.lt.s32.totalorder %s21, 5
      %p485 = pnand %p483, %p484
      %p486 = pneg %p485
      // Predicated region
      $region65: #{encoder_forward.1} parent=5 // pred_check
        _
      $region66: #{encoder_forward.1} parent=5 // pred_check_branch
        %488 = sbr.rel (%p485) target = $region68
      $region67: #{encoder_forward.1} parent=5 // pred_region
        %s489 = ssub.s32 %s21, 1
        %p490 = scmp.lt.s32.totalorder %s30, 1
        %s491 = scalar_select %p490, %s30, 1
        %s492 = smul.addr %s491, 8
        %s493 = scalar_lea.vmem %s0, %s492
        %p494 = pneg %p59
        %p495 = pneg %p56
        %p496 = scmp.lt.s32.totalorder %s30, 1
        %s497 = scalar_select %p496, %s30, 1
        %s498 = scalar_lea.vmem %s1, %s497
        %p499 = pneg %p85
        %p500 = pneg %p82
        %p501 = scmp.lt.s32.totalorder %s31, 1
        %s502 = scalar_select %p501, %s31, 1
        %s503 = smul.addr %s502, 3
        %s504 = smul.addr %s503, 8
        %s505 = scalar_lea.vmem %s2, %s504
        %p506 = pneg %p111
        %p507 = pneg %p108
        %p508 = scmp.lt.s32.totalorder %s31, 1
        %s509 = scalar_select %p508, %s31, 1
        %s510 = smul.addr %s509, 4
        %s511 = smul.addr %s510, 4
        %s512 = scalar_lea.vmem %s3, %s511
        %p513 = pneg %p137
        %p514 = pneg %p134
        %p515 = scmp.lt.s32.totalorder %s31, 1
        %s516 = scalar_select %p515, %s31, 1
        %s517 = smul.addr %s516, 8
        %s518 = smul.addr %s517, 4
        %s519 = scalar_lea.vmem %s4, %s518
        %p520 = pneg %p163
        %p521 = pneg %p160
        %p522 = scmp.lt.s32.totalorder %s31, 1
        %s523 = scalar_select %p522, %s31, 1
        %s524 = smul.addr %s523, 4
        %s525 = smul.addr %s524, 4
        %s526 = scalar_lea.vmem %s5, %s525
        %p527 = pneg %p189
        %p528 = pneg %p186
        %p529 = scmp.lt.s32.totalorder %s31, 1
        %s530 = scalar_select %p529, %s31, 1
        %s531 = smul.addr %s530, 4
        %s532 = smul.addr %s531, 4
        %s533 = scalar_lea.vmem %s6, %s532
        %p534 = pneg %p215
        %p535 = pneg %p212
        %p536 = scmp.lt.s32.totalorder %s31, 1
        %s537 = scalar_select %p536, %s31, 1
        %s538 = smul.addr %s537, 4
        %s539 = smul.addr %s538, 4
        %s540 = scalar_lea.vmem %s7, %s539
        %p541 = pneg %p241
        %p542 = pneg %p238
        %p543 = scmp.lt.s32.totalorder %s31, 1
        %s544 = scalar_select %p543, %s31, 1
        %s545 = smul.addr %s544, 4
        %s546 = smul.addr %s545, 4
        %s547 = scalar_lea.vmem %s8, %s546
        %p548 = pneg %p267
        %p549 = pneg %p264
        %p550 = scmp.lt.s32.totalorder %s31, 1
        %s551 = scalar_select %p550, %s31, 1
        %s552 = smul.addr %s551, 8
        %s553 = smul.addr %s552, 4
        %s554 = scalar_lea.vmem %s9, %s553
        %p555 = pneg %p293
        %p556 = pneg %p290
        %p557 = scmp.lt.s32.totalorder %s31, 1
        %s558 = scalar_select %p557, %s31, 1
        %s559 = smul.addr %s558, 4
        %s560 = smul.addr %s559, 4
        %s561 = scalar_lea.vmem %s10, %s560
        %p562 = pneg %p319
        %p563 = pneg %p316
        %p564 = scmp.lt.s32.totalorder %s31, 1
        %s565 = scalar_select %p564, %s31, 1
        %s566 = smul.addr %s565, 8
        %s567 = smul.addr %s566, 4
        %s568 = scalar_lea.vmem %s11, %s567
        %p569 = pneg %p345
        %p570 = pneg %p342
        %p571 = pneg %p371
        %p572 = pneg %p368
        %s573 = sand.u32 %s358, 1
        %s574 = scalar_lea.sflag [#allocation3], %s573
        %s575 = sand.u32 %s358, 1
        %s576 = smul.addr %s575, 8
        %s577 = scalar_lea.vmem [#allocation2], %s576
        %p578 = scmp.lt.s32.totalorder %s30, 1
        %s579 = scalar_select %p578, %s30, 1
        %s580 = smul.addr %s579, 8
        %s581 = scalar_lea.vmem %s0, %s580
        %p582 = scmp.lt.s32.totalorder %s30, 1
        %s583 = scalar_select %p582, %s30, 1
        %s584 = scalar_lea.vmem %s1, %s583
        %p585 = scmp.lt.s32.totalorder %s31, 1
        %s586 = scalar_select %p585, %s31, 1
        %s587 = smul.addr %s586, 3
        %s588 = smul.addr %s587, 8
        %s589 = scalar_lea.vmem %s2, %s588
        %p590 = scmp.lt.s32.totalorder %s31, 1
        %s591 = scalar_select %p590, %s31, 1
        %s592 = smul.addr %s591, 4
        %s593 = smul.addr %s592, 4
        %s594 = scalar_lea.vmem %s3, %s593
        %p595 = scmp.lt.s32.totalorder %s31, 1
        %s596 = scalar_select %p595, %s31, 1
        %s597 = smul.addr %s596, 8
        %s598 = smul.addr %s597, 4
        %s599 = scalar_lea.vmem %s4, %s598
        %p600 = scmp.lt.s32.totalorder %s31, 1
        %s601 = scalar_select %p600, %s31, 1
        %s602 = smul.addr %s601, 4
        %s603 = smul.addr %s602, 4
        %s604 = scalar_lea.vmem %s5, %s603
        %p605 = scmp.lt.s32.totalorder %s31, 1
        %s606 = scalar_select %p605, %s31, 1
        %s607 = smul.addr %s606, 4
        %s608 = smul.addr %s607, 4
        %s609 = scalar_lea.vmem %s6, %s608
        %p610 = scmp.lt.s32.totalorder %s31, 1
        %s611 = scalar_select %p610, %s31, 1
        %s612 = smul.addr %s611, 4
        %s613 = smul.addr %s612, 4
        %s614 = scalar_lea.vmem %s7, %s613
        %p615 = scmp.lt.s32.totalorder %s31, 1
        %s616 = scalar_select %p615, %s31, 1
        %s617 = smul.addr %s616, 4
        %s618 = smul.addr %s617, 4
        %s619 = scalar_lea.vmem %s8, %s618
        %p620 = scmp.lt.s32.totalorder %s31, 1
        %s621 = scalar_select %p620, %s31, 1
        %s622 = smul.addr %s621, 8
        %s623 = smul.addr %s622, 4
        %s624 = scalar_lea.vmem %s9, %s623
        %p625 = scmp.lt.s32.totalorder %s31, 1
        %s626 = scalar_select %p625, %s31, 1
        %s627 = smul.addr %s626, 4
        %s628 = smul.addr %s627, 4
        %s629 = scalar_lea.vmem %s10, %s628
        %p630 = scmp.lt.s32.totalorder %s31, 1
        %s631 = scalar_select %p630, %s31, 1
        %s632 = smul.addr %s631, 8
        %s633 = smul.addr %s632, 4
        %s634 = scalar_lea.vmem %s11, %s633
        %p636 = scmp.eq.s32.totalorder %s31, 0
        // Predicated region
        $region69: #{encoder_forward.1} parent=67 // pred_check
          %p637 = pneg %p636
        $region70: #{encoder_forward.1} parent=67 // pred_check_branch
          %639 = sbr.rel (%p637) target = $region72
        $region71: #{encoder_forward.1} parent=67 // pred_region
          %v640 = vld [vmem:[%s581] sm:$0xff]
          %vm641 = vcmask 261120
          %642 = vst.msk [vmem:[%s577] sm:$0xff] %vm641, %v640
        $region72: #{encoder_forward.1} parent=67 // pred_fallthru
          _
        %v643 = vld [vmem:[%s577] sm:$0xff]
        %v644 = vld [vmem:[%s589] sm:$0x1]
        %v645 = vld [vmem:[%s589 + $0x1] sm:$0x1]
        %vm646 = vcmask 261120
        %v647 = vsel %vm646, %v643, 0.0
        %648 = vadd.xlane.f32.xlu0 %v647
        %v649 = vpop.xlane.xlu0 %648
        %v650 = vrcp.pop 32.0
        %v651 = vmul.f32 32.0, %v650
        %v652 = vsub.f32 1.0, %v651
        %v653 = vmul.f32 %v650, %v652
        %v654 = vadd.f32 %v650, %v653
        %vm655 = vweird.f32 %v650
        %v656 = vsel %vm655, %v650, %v654
        %v657 = vmul.f32 %v649, %v656
        %v658 = vsub.f32 %v643, %v657
        %v659 = vmul.f32 %v658, %v658
        %v660 = vsel %vm646, %v659, 0.0
        %661 = vadd.xlane.f32.xlu0 %v660
        %v662 = vpop.xlane.xlu0 %661
        %v663 = vmul.f32 %v662, %v656
        %v664 = vadd.f32 %v663, 1e-05
        %v665 = vrsqrt.pop %v664
        %v666 = vmul.f32 %v665, %v664
        %v667 = vmul.f32 %v666, %v665
        %v668 = vmul.f32 0.5, %v667
        %v669 = vsub.f32 1.5, %v668
        %v670 = vmul.f32 %v665, %v669
        %vm671 = vweird.f32 %v664
        %vm672 = vweird.f32 %v665
        %vm673 = vmor %vm671, %vm672
        %v674 = vsel %vm673, %v665, %v670
        %v675 = vmul.f32 %v658, %v674
        %v676 = vperm.slane %v644, 0
        %v677 = vmul.f32 %v675, %v676
        %v678 = vperm.slane %v645, 0
        %v679 = vadd.f32 %v677, %v678
        %v680 = vpack.c.bf16 %v679, %v679
        %v681 = vld [vmem:[%s594] sm:$0xf]
        %v682 = vld [vmem:[%s594 + $0x4] sm:$0xf]
        %v683 = vld [vmem:[%s594 + $0x8] sm:$0xf]
        %v684 = vld [vmem:[%s594 + $0xc] sm:$0xf]
        %v685 = vld [vmem:[%s589 + $0x2] sm:$0x1]
        %v686 = vperm.slane %v685, 0
        %v691 = vunpack.c.l.b16 %v681
        %v692 = vunpack.c.l.b16 %v682
        %v693 = vunpack.c.l.b16 %v683
        %v694 = vunpack.c.l.b16 %v684
        %v695 = vpack.c.b16 %v692, %v691
        %v696 = vpack.c.b16 %v694, %v693
        %v700 = vsel %vm646, %v680, 0
        %702 = vmatpush.bf16.msra.mxu0 0
        %703 = vmatpush.bf16.msra.mxu0 0
        %704 = vmatpush.bf16.msra.mxu0 0
        %705 = vmatpush.bf16.msra.mxu0 0
        %706 = vmatpush.bf16.msra.mxu0 0
        %707 = vmatpush.bf16.msra.mxu0 0
        %708 = vmatpush.bf16.msra.mxu0 %v696
        %709 = vmatpush.bf16.msra.mxu0 %v695
        %710 = vmatmul.bf16.gmra.mxu0 %v700
        %v711 = vpop.f32.mrf.mxu0
        %v712 = vadd.f32 %v686, %v711
        %v713 = vpop.f32.mrf.mxu0
        %714 = vdwg.mxu0
        %v715 = vxor.u32 %v712, 2147483648
        %v716 = vmul.f32 %v715, 1.442695
        %v717 = vpow.pop %v716
        %v718 = vadd.f32 %v717, 1.0
        %v719 = vrcp.pop %v718
        %v720 = vmul.f32 %v718, %v719
        %v721 = vsub.f32 1.0, %v720
        %v722 = vmul.f32 %v719, %v721
        %v723 = vadd.f32 %v719, %v722
        %vm724 = vweird.f32 %v718
        %vm725 = vweird.f32 %v719
        %vm726 = vmor %vm724, %vm725
        %v727 = vsel %vm726, %v719, %v723
        %v728 = vand.u32 2147483647, %v718
        %vm729 = vcmp.eq.f32.partialorder %v728, 8.507059e+37
        %v730 = vand.u32 %v718, 2147483648
        %v731 = vor.u32 1.1754944e-38, %v730
        %v732 = vsel %vm729, %v731, %v727
        %v733 = vmul.f32 1.0, %v732
        %v734 = vmul.f32 %v712, %v733
        %v735 = vpack.c.bf16 %v734, %v734
        %v736 = vld [vmem:[%s599] sm:$0xf]
        %v737 = vld [vmem:[%s599 + $0x4] sm:$0xf]
        %v738 = vld [vmem:[%s599 + $0x8] sm:$0xf]
        %v739 = vld [vmem:[%s599 + $0xc] sm:$0xf]
        %v740 = vld [vmem:[%s599 + $0x10] sm:$0xf]
        %v741 = vld [vmem:[%s599 + $0x14] sm:$0xf]
        %v742 = vld [vmem:[%s599 + $0x18] sm:$0xf]
        %v743 = vld [vmem:[%s599 + $0x1c] sm:$0xf]
        %v744 = vld [vmem:[%s589 + $0x3] sm:$0x1]
        %v745 = vperm.slane %v744, 0
        %v754 = vunpack.c.l.b16 %v736
        %v755 = vunpack.c.l.b16 %v737
        %v756 = vunpack.c.l.b16 %v738
        %v757 = vunpack.c.l.b16 %v739
        %v758 = vunpack.c.l.b16 %v740
        %v759 = vunpack.c.l.b16 %v741
        %v760 = vunpack.c.l.b16 %v742
        %v761 = vunpack.c.l.b16 %v743
        %v762 = vpack.c.b16 %v755, %v754
        %v763 = vpack.c.b16 %v757, %v756
        %v764 = vpack.c.b16 %v759, %v758
        %v765 = vpack.c.b16 %v761, %v760
        %vm770 = vcmask 523264
        %v772 = vsel %vm770, %v735, 0
        %774 = vmatpush.bf16.msra.mxu0 0
        %775 = vmatpush.bf16.msra.mxu0 0
        %776 = vmatpush.bf16.msra.mxu0 0
        %777 = vmatpush.bf16.msra.mxu0 0
        %778 = vmatpush.bf16.msra.mxu0 %v765
        %779 = vmatpush.bf16.msra.mxu0 %v764
        %780 = vmatpush.bf16.msra.mxu0 %v763
        %781 = vmatpush.bf16.msra.mxu0 %v762
        %782 = vmatmul.bf16.gmra.mxu0 %v772
        %v783 = vpop.f32.mrf.mxu0
        %v784 = vadd.f32 %v745, %v783
        %v785 = vpop.f32.mrf.mxu0
        %786 = vdwg.mxu0
        %v787 = vmul.f32 %v784, 0.5
        %v788 = vadd.f32 %v643, %v787
        %v789 = vld [vmem:[%s604] sm:$0xf]
        %v790 = vld [vmem:[%s604 + $0x4] sm:$0xf]
        %v791 = vld [vmem:[%s604 + $0x8] sm:$0xf]
        %v792 = vld [vmem:[%s604 + $0xc] sm:$0xf]
        %v793 = vpack.c.bf16 %v788, %v788
        %v794 = vld [vmem:[%s589 + $0x4] sm:$0x1]
        %v795 = vperm.slane %v794, 0
        %v800 = vunpack.c.l.b16 %v789
        %v801 = vunpack.c.l.b16 %v790
        %v802 = vunpack.c.l.b16 %v791
        %v803 = vunpack.c.l.b16 %v792
        %v804 = vpack.c.b16 %v801, %v800
        %v805 = vpack.c.b16 %v803, %v802
        %v809 = vsel %vm646, %v793, 0
        %811 = vmatpush.bf16.msra.mxu0 0
        %812 = vmatpush.bf16.msra.mxu0 0
        %813 = vmatpush.bf16.msra.mxu0 0
        %814 = vmatpush.bf16.msra.mxu0 0
        %815 = vmatpush.bf16.msra.mxu0 0
        %816 = vmatpush.bf16.msra.mxu0 0
        %817 = vmatpush.bf16.msra.mxu0 %v805
        %818 = vmatpush.bf16.msra.mxu0 %v804
        %819 = vmatmul.bf16.gmra.mxu0 %v809
        %v820 = vpop.f32.mrf.mxu0
        %v821 = vadd.f32 %v795, %v820
        %v822 = vpop.f32.mrf.mxu0
        %823 = vdwg.mxu0
        %v824 = vpack.c.bf16 %v821, %v821
        %826 = vrot.lane.b32.xlu0 %v824, 112
        %v827 = vpop.permute.xlu0 %826
        %v828 = vld [vmem:[%s584] sm:$0x1]
        %v830 = vperm.slane %v828, 0
        %v832 = vunpack.c.l.b16 %v824
        %v833 = vunpack.c.l.b16 %v827
        %v834 = vpack.c.b16 %v832, %v832
        %v835 = vpack.c.b16 %v833, %v833
        %836 = vrot.lane.b32.xlu0 %v834, 96
        %v837 = vpop.permute.xlu0 %836
        %838 = vrot.lane.b32.xlu0 %v835, 96
        %v839 = vpop.permute.xlu0 %838
        %842 = vxpose.xlu0.c.b16.start [1/8] %v837, 128
        %843 = vxpose.xlu0.c.b16.cont [2/8] 0, 128
        %844 = vxpose.xlu0.c.b16.cont [3/8] 0, 128
        %845 = vxpose.xlu0.c.b16.cont [4/8] 0, 128
        %846 = vxpose.xlu0.c.b16.cont [5/8] 0, 128
        %847 = vxpose.xlu0.c.b16.cont [6/8] 0, 128
        %848 = vxpose.xlu0.c.b16.cont [7/8] 0, 128
        %849 = vxpose.xlu0.c.b16.end [8/8] 0, 128
        %v850 = vpop.trf.xlu0
        %v851 = vpop.trf.xlu0
        %v852 = vpop.trf.xlu0
        %v853 = vpop.trf.xlu0
        %v854 = vpop.trf.xlu0
        %v855 = vpop.trf.xlu0
        %v856 = vpop.trf.xlu0
        %v857 = vpop.trf.xlu0
        %858 = vxpose.xlu0.c.b16.start [1/8] %v839, 128
        %859 = vxpose.xlu0.c.b16.cont [2/8] 0, 128
        %860 = vxpose.xlu0.c.b16.cont [3/8] 0, 128
        %861 = vxpose.xlu0.c.b16.cont [4/8] 0, 128
        %862 = vxpose.xlu0.c.b16.cont [5/8] 0, 128
        %863 = vxpose.xlu0.c.b16.cont [6/8] 0, 128
        %864 = vxpose.xlu0.c.b16.cont [7/8] 0, 128
        %865 = vxpose.xlu0.c.b16.end [8/8] 0, 128
        %v866 = vpop.trf.xlu0
        %v867 = vpop.trf.xlu0
        %v868 = vpop.trf.xlu0
        %v869 = vpop.trf.xlu0
        %v870 = vpop.trf.xlu0
        %v871 = vpop.trf.xlu0
        %v872 = vpop.trf.xlu0
        %v873 = vpop.trf.xlu0
        %vm874 = vcmask 130048
        %v876 = vsel %vm874, %v824, 0
        %878 = vmatpush.bf16.msra.mxu0 0
        %879 = vmatpush.bf16.msra.mxu0 0
        %880 = vmatpush.bf16.msra.mxu0 0
        %881 = vmatpush.bf16.msra.mxu0 0
        %882 = vmatpush.bf16.msra.mxu0 0
        %883 = vmatpush.bf16.msra.mxu0 0
        %884 = vmatpush.bf16.msra.mxu0 0
        %885 = vmatpush.bf16.msra.mxu0 %v850
        %886 = vmatmul.bf16.gmra.mxu0 %v876
        %v887 = vpop.f32.mrf.mxu0
        %v888 = vadd.f32 %v830, %v887
        %v889 = vpop.f32.mrf.mxu0
        %890 = vdwg.mxu0
        %v892 = vsel %vm874, %v827, 0
        %894 = vmatpush.bf16.msra.mxu0 0
        %895 = vmatpush.bf16.msra.mxu0 0
        %896 = vmatpush.bf16.msra.mxu0 0
        %897 = vmatpush.bf16.msra.mxu0 0
        %898 = vmatpush.bf16.msra.mxu0 0
        %899 = vmatpush.bf16.msra.mxu0 0
        %900 = vmatpush.bf16.msra.mxu0 0
        %901 = vmatpush.bf16.msra.mxu0 %v866
        %902 = vmatmul.bf16.gmra.mxu0 %v892
        %v903 = vpop.f32.mrf.mxu0
        %v904 = vadd.f32 %v830, %v903
        %v905 = vpop.f32.mrf.mxu0
        %906 = vdwg.mxu0
        %vm907 = vcmask 64512
        %v908 = vsel %vm907, %v888, -inf
        %909 = vmax.xlane.f32.xlu0 %v908
        %v910 = vpop.xlane.xlu0 %909
        %v911 = vsel %vm907, %v904, -inf
        %912 = vmax.xlane.f32.xlu0 %v911
        %v913 = vpop.xlane.xlu0 %912
        %v914 = vsub.f32 %v888, %v910
        %v915 = vsub.f32 %v904, %v913
        %v916 = vmul.f32 %v914, 1.442695
        %v917 = vpow.pop %v916
        %v918 = vmul.f32 %v915, 1.442695
        %v919 = vpow.pop %v918
        %v920 = vsel %vm907, %v917, 0.0
        %921 = vadd.xlane.f32.xlu0 %v920
        %v922 = vpop.xlane.xlu0 %921
        %v923 = vsel %vm907, %v919, 0.0
        %924 = vadd.xlane.f32.xlu0 %v923
        %v925 = vpop.xlane.xlu0 %924
        %v926 = vrcp.pop %v922
        %v927 = vrcp.pop %v925
        %v928 = vmul.f32 %v917, %v926
        %v929 = vmul.f32 %v919, %v927
        %v930 = vpack.c.bf16 %v928, %v928
        %v931 = vpack.c.bf16 %v929, %v929
        %932 = vrot.lane.b32.xlu0 %v834, 64
        %v933 = vpop.permute.xlu0 %932
        %934 = vrot.lane.b32.xlu0 %v835, 64
        %v935 = vpop.permute.xlu0 %934
        %938 = vxpose.xlu0.c.b16.start [1/8] %v933, 128
        %939 = vxpose.xlu0.c.b16.cont [2/8] 0, 128
        %940 = vxpose.xlu0.c.b16.cont [3/8] 0, 128
        %941 = vxpose.xlu0.c.b16.cont [4/8] 0, 128
        %942 = vxpose.xlu0.c.b16.cont [5/8] 0, 128
        %943 = vxpose.xlu0.c.b16.cont [6/8] 0, 128
        %944 = vxpose.xlu0.c.b16.cont [7/8] 0, 128
        %945 = vxpose.xlu0.c.b16.end [8/8] 0, 128
        %v946 = vpop.trf.xlu0
        %v947 = vpop.trf.xlu0
        %v948 = vpop.trf.xlu0
        %v949 = vpop.trf.xlu0
        %v950 = vpop.trf.xlu0
        %v951 = vpop.trf.xlu0
        %v952 = vpop.trf.xlu0
        %v953 = vpop.trf.xlu0
        %954 = vxpose.xlu0.c.b16.start [1/8] %v935, 128
        %955 = vxpose.xlu0.c.b16.cont [2/8] 0, 128
        %956 = vxpose.xlu0.c.b16.cont [3/8] 0, 128
        %957 = vxpose.xlu0.c.b16.cont [4/8] 0, 128
        %958 = vxpose.xlu0.c.b16.cont [5/8] 0, 128
        %959 = vxpose.xlu0.c.b16.cont [6/8] 0, 128
        %960 = vxpose.xlu0.c.b16.cont [7/8] 0, 128
        %961 = vxpose.xlu0.c.b16.end [8/8] 0, 128
        %v962 = vpop.trf.xlu0
        %v963 = vpop.trf.xlu0
        %v964 = vpop.trf.xlu0
        %v965 = vpop.trf.xlu0
        %v966 = vpop.trf.xlu0
        %v967 = vpop.trf.xlu0
        %v968 = vpop.trf.xlu0
        %v969 = vpop.trf.xlu0
        %v971 = vsel %vm907, %v946, 0
        %v974 = vsel %vm907, %v930, 0
        %976 = vmatpush.bf16.xpose.msra.mxu0 0
        %977 = vmatpush.bf16.xpose.msra.mxu0 0
        %978 = vmatpush.bf16.xpose.msra.mxu0 0
        %979 = vmatpush.bf16.xpose.msra.mxu0 0
        %980 = vmatpush.bf16.xpose.msra.mxu0 0
        %981 = vmatpush.bf16.xpose.msra.mxu0 0
        %982 = vmatpush.bf16.xpose.msra.mxu0 0
        %983 = vmatpush.bf16.xpose.msra.mxu0 %v974
        %984 = vmatmul.bf16.gmra.mxu0 %v971
        %v985 = vpop.f32.mrf.mxu0
        %v986 = vadd.f32 0.0, %v985
        %v987 = vpop.f32.mrf.mxu0
        %v988 = vadd.f32 0.0, %v987
        %989 = vdwg.mxu0
        %v991 = vsel %vm907, %v962, 0
        %v994 = vsel %vm907, %v931, 0
        %996 = vmatpush.bf16.xpose.msra.mxu0 0
        %997 = vmatpush.bf16.xpose.msra.mxu0 0
        %998 = vmatpush.bf16.xpose.msra.mxu0 0
        %999 = vmatpush.bf16.xpose.msra.mxu0 0
        %1000 = vmatpush.bf16.xpose.msra.mxu0 0
        %1001 = vmatpush.bf16.xpose.msra.mxu0 0
        %1002 = vmatpush.bf16.xpose.msra.mxu0 0
        %1003 = vmatpush.bf16.xpose.msra.mxu0 %v994
        %1004 = vmatmul.bf16.gmra.mxu0 %v991
        %v1005 = vpop.f32.mrf.mxu0
        %v1006 = vadd.f32 0.0, %v1005
        %v1007 = vpop.f32.mrf.mxu0
        %v1008 = vadd.f32 0.0, %v1007
        %1009 = vdwg.mxu0
        %1010 = vxpose.xlu0.b32.start [1/16] %v986, 128
        %1011 = vxpose.xlu0.b32.cont [2/16] %v988, 128
        %1012 = vxpose.xlu0.b32.cont [3/16] 0.0, 128
        %1013 = vxpose.xlu0.b32.cont [4/16] 0.0, 128
        %1014 = vxpose.xlu0.b32.cont [5/16] 0.0, 128
        %1015 = vxpose.xlu0.b32.cont [6/16] 0.0, 128
        %1016 = vxpose.xlu0.b32.cont [7/16] 0.0, 128
        %1017 = vxpose.xlu0.b32.cont [8/16] 0.0, 128
        %1018 = vxpose.xlu0.b32.cont [9/16] 0.0, 128
        %1019 = vxpose.xlu0.b32.cont [10/16] 0.0, 128
        %1020 = vxpose.xlu0.b32.cont [11/16] 0.0, 128
        %1021 = vxpose.xlu0.b32.cont [12/16] 0.0, 128
        %1022 = vxpose.xlu0.b32.cont [13/16] 0.0, 128
        %1023 = vxpose.xlu0.b32.cont [14/16] 0.0, 128
        %1024 = vxpose.xlu0.b32.cont [15/16] 0.0, 128
        %1025 = vxpose.xlu0.b32.end [16/16] 0.0, 128
        %v1026 = vpop.trf.xlu0
        %v1027 = vpop.trf.xlu0
        %v1028 = vpop.trf.xlu0
        %v1029 = vpop.trf.xlu0
        %v1030 = vpop.trf.xlu0
        %v1031 = vpop.trf.xlu0
        %v1032 = vpop.trf.xlu0
        %v1033 = vpop.trf.xlu0
        %v1034 = vpop.trf.xlu0
        %v1035 = vpop.trf.xlu0
        %v1036 = vpop.trf.xlu0
        %v1037 = vpop.trf.xlu0
        %v1038 = vpop.trf.xlu0
        %v1039 = vpop.trf.xlu0
        %v1040 = vpop.trf.xlu0
        %v1041 = vpop.trf.xlu0
        %1042 = vxpose.xlu0.b32.start [1/16] %v1006, 128
        %1043 = vxpose.xlu0.b32.cont [2/16] %v1008, 128
        %1044 = vxpose.xlu0.b32.cont [3/16] 0.0, 128
        %1045 = vxpose.xlu0.b32.cont [4/16] 0.0, 128
        %1046 = vxpose.xlu0.b32.cont [5/16] 0.0, 128
        %1047 = vxpose.xlu0.b32.cont [6/16] 0.0, 128
        %1048 = vxpose.xlu0.b32.cont [7/16] 0.0, 128
        %1049 = vxpose.xlu0.b32.cont [8/16] 0.0, 128
        %1050 = vxpose.xlu0.b32.cont [9/16] 0.0, 128
        %1051 = vxpose.xlu0.b32.cont [10/16] 0.0, 128
        %1052 = vxpose.xlu0.b32.cont [11/16] 0.0, 128
        %1053 = vxpose.xlu0.b32.cont [12/16] 0.0, 128
        %1054 = vxpose.xlu0.b32.cont [13/16] 0.0, 128
        %1055 = vxpose.xlu0.b32.cont [14/16] 0.0, 128
        %1056 = vxpose.xlu0.b32.cont [15/16] 0.0, 128
        %1057 = vxpose.xlu0.b32.end [16/16] 0.0, 128
        %v1058 = vpop.trf.xlu0
        %v1059 = vpop.trf.xlu0
        %v1060 = vpop.trf.xlu0
        %v1061 = vpop.trf.xlu0
        %v1062 = vpop.trf.xlu0
        %v1063 = vpop.trf.xlu0
        %v1064 = vpop.trf.xlu0
        %v1065 = vpop.trf.xlu0
        %v1066 = vpop.trf.xlu0
        %v1067 = vpop.trf.xlu0
        %v1068 = vpop.trf.xlu0
        %v1069 = vpop.trf.xlu0
        %v1070 = vpop.trf.xlu0
        %v1071 = vpop.trf.xlu0
        %v1072 = vpop.trf.xlu0
        %v1073 = vpop.trf.xlu0
        %v1074 = vrot.slane %v1026, 4
        %vm1075 = vcmask 1047556
        %v1076 = vsel %vm1075, 0.0, %v1074
        %v1078 = vunpack.c.l.s4 1983009808
        %v1079 = vunpack.c.0.s8 %v1078
        %v1080 = vperm.slane %v1026, %v1079
        %v1082 = vunpack.c.l.s4 1983009808
        %v1083 = vunpack.c.0.s8 %v1082
        %v1084 = vperm.slane %v1076, %v1083
        %v1085 = vrot.slane %v1058, 4
        %v1086 = vsel %vm1075, 0.0, %v1085
        %v1088 = vunpack.c.l.s4 1983009808
        %v1089 = vunpack.c.0.s8 %v1088
        %v1090 = vperm.slane %v1058, %v1089
        %v1092 = vunpack.c.l.s4 1983009808
        %v1093 = vunpack.c.0.s8 %v1092
        %v1094 = vperm.slane %v1086, %v1093
        %v1095 = vrot.slane %v1090, 4
        %v1096 = vsel %vm1075, %v1095, %v1080
        %v1097 = vrot.slane %v1080, 4
        %v1098 = vsel %vm1075, %v1090, %v1097
        %v1100 = vunpack.c.l.s4 1934713408
        %v1101 = vunpack.c.0.s8 %v1100
        %v1102 = vperm.slane %v1096, %v1101
        %v1104 = vunpack.c.l.s4 1934713408
        %v1105 = vunpack.c.0.s8 %v1104
        %v1106 = vperm.slane %v1098, %v1105
        %v1107 = vrot.slane %v1094, 4
        %v1108 = vsel %vm1075, %v1107, %v1084
        %v1109 = vrot.slane %v1084, 4
        %v1110 = vsel %vm1075, %v1094, %v1109
        %v1112 = vunpack.c.l.s4 1934713408
        %v1113 = vunpack.c.0.s8 %v1112
        %v1114 = vperm.slane %v1108, %v1113
        %v1116 = vunpack.c.l.s4 1934713408
        %v1117 = vunpack.c.0.s8 %v1116
        %v1118 = vperm.slane %v1110, %v1117
        %v1119 = vrot.slane %v1102, 4
        %v1120 = vsel %vm1075, 0.0, %v1119
        %v1121 = vrot.slane %v1106, 4
        %v1122 = vsel %vm1075, 0.0, %v1121
        %v1123 = vrot.slane %v1114, 4
        %v1124 = vsel %vm1075, 0.0, %v1123
        %v1125 = vrot.slane %v1118, 4
        %v1126 = vsel %vm1075, 0.0, %v1125
        %v1127 = vsel %vm1075, %v1121, %v1102
        %v1129 = vunpack.c.l.s4 1983009808
        %v1130 = vunpack.c.0.s8 %v1129
        %v1131 = vperm.slane %v1127, %v1130
        %v1132 = vrot.slane %v1122, 4
        %v1133 = vsel %vm1075, %v1132, %v1120
        %v1135 = vunpack.c.l.s4 1983009808
        %v1136 = vunpack.c.0.s8 %v1135
        %v1137 = vperm.slane %v1133, %v1136
        %v1138 = vsel %vm1075, %v1125, %v1114
        %v1140 = vunpack.c.l.s4 1983009808
        %v1141 = vunpack.c.0.s8 %v1140
        %v1142 = vperm.slane %v1138, %v1141
        %v1143 = vrot.slane %v1126, 4
        %v1144 = vsel %vm1075, %v1143, %v1124
        %v1146 = vunpack.c.l.s4 1983009808
        %v1147 = vunpack.c.0.s8 %v1146
        %v1148 = vperm.slane %v1144, %v1147
        %v1149 = vrot.slane %v1137, 4
        %v1150 = vsel %vm1075, %v1149, %v1131
        %v1152 = vunpack.c.l.s4 1934713408
        %v1153 = vunpack.c.0.s8 %v1152
        %v1154 = vperm.slane %v1150, %v1153
        %v1155 = vrot.slane %v1148, 4
        %v1156 = vsel %vm1075, %v1155, %v1142
        %v1158 = vunpack.c.l.s4 1934713408
        %v1159 = vunpack.c.0.s8 %v1158
        %v1160 = vperm.slane %v1156, %v1159
        %v1161 = vrot.slane %v1160, 4
        %v1162 = vsel %vm1075, %v1161, %v1154
        %v1163 = vrot.slane %v1154, 4
        %v1164 = vsel %vm1075, %v1160, %v1163
        %1166 = vrot.lane.b32.xlu0 %v1164, 16
        %v1167 = vpop.permute.xlu0 %1166
        %v1169 = vsel %vm874, %v1162, %v1167
        %v1170 = vpack.c.bf16 %v1169, %v1169
        %v1171 = vld [vmem:[%s609] sm:$0xf]
        %v1172 = vld [vmem:[%s609 + $0x4] sm:$0xf]
        %v1173 = vld [vmem:[%s609 + $0x8] sm:$0xf]
        %v1174 = vld [vmem:[%s609 + $0xc] sm:$0xf]
        %v1175 = vld [vmem:[%s589 + $0x5] sm:$0x1]
        %v1176 = vperm.slane %v1175, 0
        %v1181 = vunpack.c.l.b16 %v1171
        %v1182 = vunpack.c.l.b16 %v1172
        %v1183 = vunpack.c.l.b16 %v1173
        %v1184 = vunpack.c.l.b16 %v1174
        %v1185 = vpack.c.b16 %v1182, %v1181
        %v1186 = vpack.c.b16 %v1184, %v1183
        %v1190 = vsel %vm646, %v1170, 0
        %1192 = vmatpush.bf16.msra.mxu0 0
        %1193 = vmatpush.bf16.msra.mxu0 0
        %1194 = vmatpush.bf16.msra.mxu0 0
        %1195 = vmatpush.bf16.msra.mxu0 0
        %1196 = vmatpush.bf16.msra.mxu0 0
        %1197 = vmatpush.bf16.msra.mxu0 0
        %1198 = vmatpush.bf16.msra.mxu0 %v1186
        %1199 = vmatpush.bf16.msra.mxu0 %v1185
        %1200 = vmatmul.bf16.gmra.mxu0 %v1190
        %v1201 = vpop.f32.mrf.mxu0
        %v1202 = vadd.f32 %v1176, %v1201
        %v1203 = vpop.f32.mrf.mxu0
        %1204 = vdwg.mxu0
        %v1205 = vadd.f32 %v1202, %v788
        %v1206 = vld [vmem:[%s589 + $0x6] sm:$0x1]
        %v1207 = vld [vmem:[%s589 + $0x7] sm:$0x1]
        %v1208 = vsel %vm646, %v1205, 0.0
        %1209 = vadd.xlane.f32.xlu0 %v1208
        %v1210 = vpop.xlane.xlu0 %1209
        %v1211 = vmul.f32 %v1210, %v656
        %v1212 = vsub.f32 %v1205, %v1211
        %v1213 = vmul.f32 %v1212, %v1212
        %v1214 = vsel %vm646, %v1213, 0.0
        %1215 = vadd.xlane.f32.xlu0 %v1214
        %v1216 = vpop.xlane.xlu0 %1215
        %v1217 = vmul.f32 %v1216, %v656
        %v1218 = vadd.f32 %v1217, 1e-05
        %v1219 = vrsqrt.pop %v1218
        %v1220 = vmul.f32 %v1219, %v1218
        %v1221 = vmul.f32 %v1220, %v1219
        %v1222 = vmul.f32 0.5, %v1221
        %v1223 = vsub.f32 1.5, %v1222
        %v1224 = vmul.f32 %v1219, %v1223
        %vm1225 = vweird.f32 %v1218
        %vm1226 = vweird.f32 %v1219
        %vm1227 = vmor %vm1225, %vm1226
        %v1228 = vsel %vm1227, %v1219, %v1224
        %v1229 = vmul.f32 %v1212, %v1228
        %v1230 = vperm.slane %v1206, 0
        %v1231 = vmul.f32 %v1229, %v1230
        %v1232 = vperm.slane %v1207, 0
        %v1233 = vadd.f32 %v1231, %v1232
        %v1234 = vld [vmem:[%s589 + $0x8] sm:$0x1]
        %v1235 = vld [vmem:[%s589 + $0x9] sm:$0x1]
        %v1236 = vsel %vm646, %v1233, 0.0
        %1237 = vadd.xlane.f32.xlu0 %v1236
        %v1238 = vpop.xlane.xlu0 %1237
        %v1239 = vmul.f32 %v1238, %v656
        %v1240 = vsub.f32 %v1233, %v1239
        %v1241 = vmul.f32 %v1240, %v1240
        %v1242 = vsel %vm646, %v1241, 0.0
        %1243 = vadd.xlane.f32.xlu0 %v1242
        %v1244 = vpop.xlane.xlu0 %1243
        %v1245 = vmul.f32 %v1244, %v656
        %v1246 = vadd.f32 %v1245, 1e-05
        %v1247 = vrsqrt.pop %v1246
        %v1248 = vmul.f32 %v1247, %v1246
        %v1249 = vmul.f32 %v1248, %v1247
        %v1250 = vmul.f32 0.5, %v1249
        %v1251 = vsub.f32 1.5, %v1250
        %v1252 = vmul.f32 %v1247, %v1251
        %vm1253 = vweird.f32 %v1246
        %vm1254 = vweird.f32 %v1247
        %vm1255 = vmor %vm1253, %vm1254
        %v1256 = vsel %vm1255, %v1247, %v1252
        %v1257 = vmul.f32 %v1240, %v1256
        %v1258 = vperm.slane %v1234, 0
        %v1259 = vmul.f32 %v1257, %v1258
        %v1260 = vperm.slane %v1235, 0
        %v1261 = vadd.f32 %v1259, %v1260
        %v1262 = vpack.c.bf16 %v1261, %v1261
        %v1263 = vld [vmem:[%s614] sm:$0xf]
        %v1264 = vld [vmem:[%s614 + $0x4] sm:$0xf]
        %v1265 = vld [vmem:[%s614 + $0x8] sm:$0xf]
        %v1266 = vld [vmem:[%s614 + $0xc] sm:$0xf]
        %v1267 = vld [vmem:[%s589 + $0xa] sm:$0x1]
        %v1268 = vperm.slane %v1267, 0
        %v1273 = vunpack.c.l.b16 %v1263
        %v1274 = vunpack.c.l.b16 %v1264
        %v1275 = vunpack.c.l.b16 %v1265
        %v1276 = vunpack.c.l.b16 %v1266
        %v1277 = vpack.c.b16 %v1274, %v1273
        %v1278 = vpack.c.b16 %v1276, %v1275
        %v1282 = vsel %vm646, %v1262, 0
        %1284 = vmatpush.bf16.msra.mxu0 0
        %1285 = vmatpush.bf16.msra.mxu0 0
        %1286 = vmatpush.bf16.msra.mxu0 0
        %1287 = vmatpush.bf16.msra.mxu0 0
        %1288 = vmatpush.bf16.msra.mxu0 0
        %1289 = vmatpush.bf16.msra.mxu0 0
        %1290 = vmatpush.bf16.msra.mxu0 %v1278
        %1291 = vmatpush.bf16.msra.mxu0 %v1277
        %1292 = vmatmul.bf16.gmra.mxu0 %v1282
        %v1293 = vpop.f32.mrf.mxu0
        %v1294 = vadd.f32 %v1268, %v1293
        %v1295 = vpop.f32.mrf.mxu0
        %1296 = vdwg.mxu0
        %v1297 = vld [vmem:[%s619] sm:$0xf]
        %v1298 = vld [vmem:[%s619 + $0x4] sm:$0xf]
        %v1299 = vld [vmem:[%s619 + $0x8] sm:$0xf]
        %v1300 = vld [vmem:[%s619 + $0xc] sm:$0xf]
        %v1301 = vld [vmem:[%s589 + $0xb] sm:$0x1]
        %v1302 = vperm.slane %v1301, 0
        %v1307 = vunpack.c.l.b16 %v1297
        %v1308 = vunpack.c.l.b16 %v1298
        %v1309 = vunpack.c.l.b16 %v1299
        %v1310 = vunpack.c.l.b16 %v1300
        %v1311 = vpack.c.b16 %v1308, %v1307
        %v1312 = vpack.c.b16 %v1310, %v1309
        %1315 = vmatpush.bf16.msra.mxu0 0
        %1316 = vmatpush.bf16.msra.mxu0 0
        %1317 = vmatpush.bf16.msra.mxu0 0
        %1318 = vmatpush.bf16.msra.mxu0 0
        %1319 = vmatpush.bf16.msra.mxu0 0
        %1320 = vmatpush.bf16.msra.mxu0 0
        %1321 = vmatpush.bf16.msra.mxu0 %v1312
        %1322 = vmatpush.bf16.msra.mxu0 %v1311
        %1323 = vmatmul.bf16.gmra.mxu0 %v1282
        %v1324 = vpop.f32.mrf.mxu0
        %v1325 = vadd.f32 %v1302, %v1324
        %v1326 = vpop.f32.mrf.mxu0
        %1327 = vdwg.mxu0
        %v1328 = vxor.u32 %v1325, 2147483648
        %v1329 = vmul.f32 %v1328, 1.442695
        %v1330 = vpow.pop %v1329
        %v1331 = vadd.f32 %v1330, 1.0
        %v1332 = vrcp.pop %v1331
        %v1333 = vmul.f32 %v1331, %v1332
        %v1334 = vsub.f32 1.0, %v1333
        %v1335 = vmul.f32 %v1332, %v1334
        %v1336 = vadd.f32 %v1332, %v1335
        %vm1337 = vweird.f32 %v1331
        %vm1338 = vweird.f32 %v1332
        %vm1339 = vmor %vm1337, %vm1338
        %v1340 = vsel %vm1339, %v1332, %v1336
        %v1341 = vand.u32 2147483647, %v1331
        %vm1342 = vcmp.eq.f32.partialorder %v1341, 8.507059e+37
        %v1343 = vand.u32 %v1331, 2147483648
        %v1344 = vor.u32 1.1754944e-38, %v1343
        %v1345 = vsel %vm1342, %v1344, %v1340
        %v1346 = vmul.f32 1.0, %v1345
        %v1347 = vmul.f32 %v1294, %v1346
        %v1348 = vlaneseq
        %v1349 = vshrl.u32 %v1348, 7
        %v1350 = vrot.slane %v1347, 7
        %v1351 = vadd.s32 %v1349, 4294967295
        %vm1352 = vcmp.ge.s32.totalorder %v1351, 0
        %vm1353 = vcmp.lt.s32.totalorder %v1351, 8
        %vm1354 = vmand %vm1352, %vm1353
        %v1355 = vsel %vm1354, 1, 0
        %vm1356 = vcmp.eq.s32.totalorder %v1355, 1
        %v1357 = vsel %vm1356, %v1350, 0.0
        %v1358 = vld [vmem:[%s589 + $0x14] sm:$0x1]
        %v1359 = vperm.slane %v1358, 0
        %v1360 = vmul.f32 %v1357, %v1359
        %v1361 = vadd.f32 %v1360, 0.0
        %vm1362 = vcmp.ge.s32.totalorder %v1349, 0
        %vm1363 = vcmp.lt.s32.totalorder %v1349, 8
        %vm1364 = vmand %vm1362, %vm1363
        %v1365 = vsel %vm1364, 1, 0
        %vm1366 = vcmp.eq.s32.totalorder %v1365, 1
        %v1367 = vsel %vm1366, %v1347, 0.0
        %v1368 = vld [vmem:[%s589 + $0x15] sm:$0x1]
        %v1369 = vperm.slane %v1368, 0
        %v1370 = vmul.f32 %v1367, %v1369
        %v1371 = vadd.f32 %v1361, %v1370
        %v1372 = vrot.slane %v1347, 1
        %v1373 = vadd.s32 %v1349, 1
        %vm1374 = vcmp.ge.s32.totalorder %v1373, 0
        %vm1375 = vcmp.lt.s32.totalorder %v1373, 8
        %vm1376 = vmand %vm1374, %vm1375
        %v1377 = vsel %vm1376, 1, 0
        %vm1378 = vcmp.eq.s32.totalorder %v1377, 1
        %v1379 = vsel %vm1378, %v1372, 0.0
        %v1380 = vld [vmem:[%s589 + $0x16] sm:$0x1]
        %v1381 = vperm.slane %v1380, 0
        %v1382 = vmul.f32 %v1379, %v1381
        %v1383 = vadd.f32 %v1371, %v1382
        %v1384 = vld [vmem:[%s589 + $0xc] sm:$0x1]
        %v1385 = vperm.slane %v1384, 0
        %v1386 = vadd.f32 %v1383, %v1385
        %v1387 = vxor.u32 %v1386, 2147483648
        %v1388 = vmul.f32 %v1387, 1.442695
        %v1389 = vpow.pop %v1388
        %v1390 = vadd.f32 %v1389, 1.0
        %v1391 = vrcp.pop %v1390
        %v1392 = vmul.f32 %v1390, %v1391
        %v1393 = vsub.f32 1.0, %v1392
        %v1394 = vmul.f32 %v1391, %v1393
        %v1395 = vadd.f32 %v1391, %v1394
        %vm1396 = vweird.f32 %v1390
        %vm1397 = vweird.f32 %v1391
        %vm1398 = vmor %vm1396, %vm1397
        %v1399 = vsel %vm1398, %v1391, %v1395
        %v1400 = vand.u32 2147483647, %v1390
        %vm1401 = vcmp.eq.f32.partialorder %v1400, 8.507059e+37
        %v1402 = vand.u32 %v1390, 2147483648
        %v1403 = vor.u32 1.1754944e-38, %v1402
        %v1404 = vsel %vm1401, %v1403, %v1399
        %v1405 = vmul.f32 1.0, %v1404
        %v1406 = vmul.f32 %v1386, %v1405
        %v1407 = vpack.c.bf16 %v1406, %v1406
        %v1408 = vld [vmem:[%s624] sm:$0xf]
        %v1409 = vld [vmem:[%s624 + $0x4] sm:$0xf]
        %v1410 = vld [vmem:[%s624 + $0x8] sm:$0xf]
        %v1411 = vld [vmem:[%s624 + $0xc] sm:$0xf]
        %v1412 = vld [vmem:[%s624 + $0x10] sm:$0xf]
        %v1413 = vld [vmem:[%s624 + $0x14] sm:$0xf]
        %v1414 = vld [vmem:[%s624 + $0x18] sm:$0xf]
        %v1415 = vld [vmem:[%s624 + $0x1c] sm:$0xf]
        %v1416 = vld [vmem:[%s589 + $0xd] sm:$0x1]
        %v1417 = vperm.slane %v1416, 0
        %v1426 = vunpack.c.l.b16 %v1408
        %v1427 = vunpack.c.l.b16 %v1409
        %v1428 = vunpack.c.l.b16 %v1410
        %v1429 = vunpack.c.l.b16 %v1411
        %v1430 = vunpack.c.l.b16 %v1412
        %v1431 = vunpack.c.l.b16 %v1413
        %v1432 = vunpack.c.l.b16 %v1414
        %v1433 = vunpack.c.l.b16 %v1415
        %v1434 = vpack.c.b16 %v1427, %v1426
        %v1435 = vpack.c.b16 %v1429, %v1428
        %v1436 = vpack.c.b16 %v1431, %v1430
        %v1437 = vpack.c.b16 %v1433, %v1432
        %v1443 = vsel %vm770, %v1407, 0
        %1445 = vmatpush.bf16.msra.mxu0 0
        %1446 = vmatpush.bf16.msra.mxu0 0
        %1447 = vmatpush.bf16.msra.mxu0 0
        %1448 = vmatpush.bf16.msra.mxu0 0
        %1449 = vmatpush.bf16.msra.mxu0 %v1437
        %1450 = vmatpush.bf16.msra.mxu0 %v1436
        %1451 = vmatpush.bf16.msra.mxu0 %v1435
        %1452 = vmatpush.bf16.msra.mxu0 %v1434
        %1453 = vmatmul.bf16.gmra.mxu0 %v1443
        %v1454 = vpop.f32.mrf.mxu0
        %v1455 = vadd.f32 %v1417, %v1454
        %v1456 = vpop.f32.mrf.mxu0
        %1457 = vdwg.mxu0
        %v1458 = vadd.f32 %v1233, %v1455
        %v1459 = vld [vmem:[%s589 + $0xe] sm:$0x1]
        %v1460 = vld [vmem:[%s589 + $0xf] sm:$0x1]
        %v1461 = vsel %vm646, %v1458, 0.0
        %1462 = vadd.xlane.f32.xlu0 %v1461
        %v1463 = vpop.xlane.xlu0 %1462
        %v1464 = vmul.f32 %v1463, %v656
        %v1465 = vsub.f32 %v1458, %v1464
        %v1466 = vmul.f32 %v1465, %v1465
        %v1467 = vsel %vm646, %v1466, 0.0
        %1468 = vadd.xlane.f32.xlu0 %v1467
        %v1469 = vpop.xlane.xlu0 %1468
        %v1470 = vmul.f32 %v1469, %v656
        %v1471 = vadd.f32 %v1470, 1e-05
        %v1472 = vrsqrt.pop %v1471
        %v1473 = vmul.f32 %v1472, %v1471
        %v1474 = vmul.f32 %v1473, %v1472
        %v1475 = vmul.f32 0.5, %v1474
        %v1476 = vsub.f32 1.5, %v1475
        %v1477 = vmul.f32 %v1472, %v1476
        %vm1478 = vweird.f32 %v1471
        %vm1479 = vweird.f32 %v1472
        %vm1480 = vmor %vm1478, %vm1479
        %v1481 = vsel %vm1480, %v1472, %v1477
        %v1482 = vmul.f32 %v1465, %v1481
        %v1483 = vperm.slane %v1459, 0
        %v1484 = vmul.f32 %v1482, %v1483
        %v1485 = vperm.slane %v1460, 0
        %v1486 = vadd.f32 %v1484, %v1485
        %v1487 = vpack.c.bf16 %v1486, %v1486
        %v1488 = vld [vmem:[%s629] sm:$0xf]
        %v1489 = vld [vmem:[%s629 + $0x4] sm:$0xf]
        %v1490 = vld [vmem:[%s629 + $0x8] sm:$0xf]
        %v1491 = vld [vmem:[%s629 + $0xc] sm:$0xf]
        %v1492 = vld [vmem:[%s589 + $0x10] sm:$0x1]
        %v1493 = vperm.slane %v1492, 0
        %v1498 = vunpack.c.l.b16 %v1488
        %v1499 = vunpack.c.l.b16 %v1489
        %v1500 = vunpack.c.l.b16 %v1490
        %v1501 = vunpack.c.l.b16 %v1491
        %v1502 = vpack.c.b16 %v1499, %v1498
        %v1503 = vpack.c.b16 %v1501, %v1500
        %v1507 = vsel %vm646, %v1487, 0
        %1509 = vmatpush.bf16.msra.mxu0 0
        %1510 = vmatpush.bf16.msra.mxu0 0
        %1511 = vmatpush.bf16.msra.mxu0 0
        %1512 = vmatpush.bf16.msra.mxu0 0
        %1513 = vmatpush.bf16.msra.mxu0 0
        %1514 = vmatpush.bf16.msra.mxu0 0
        %1515 = vmatpush.bf16.msra.mxu0 %v1503
        %1516 = vmatpush.bf16.msra.mxu0 %v1502
        %1517 = vmatmul.bf16.gmra.mxu0 %v1507
        %v1518 = vpop.f32.mrf.mxu0
        %v1519 = vadd.f32 %v1493, %v1518
        %v1520 = vpop.f32.mrf.mxu0
        %1521 = vdwg.mxu0
        %v1522 = vxor.u32 %v1519, 2147483648
        %v1523 = vmul.f32 %v1522, 1.442695
        %v1524 = vpow.pop %v1523
        %v1525 = vadd.f32 %v1524, 1.0
        %v1526 = vrcp.pop %v1525
        %v1527 = vmul.f32 %v1525, %v1526
        %v1528 = vsub.f32 1.0, %v1527
        %v1529 = vmul.f32 %v1526, %v1528
        %v1530 = vadd.f32 %v1526, %v1529
        %vm1531 = vweird.f32 %v1525
        %vm1532 = vweird.f32 %v1526
        %vm1533 = vmor %vm1531, %vm1532
        %v1534 = vsel %vm1533, %v1526, %v1530
        %v1535 = vand.u32 2147483647, %v1525
        %vm1536 = vcmp.eq.f32.partialorder %v1535, 8.507059e+37
        %v1537 = vand.u32 %v1525, 2147483648
        %v1538 = vor.u32 1.1754944e-38, %v1537
        %v1539 = vsel %vm1536, %v1538, %v1534
        %v1540 = vmul.f32 1.0, %v1539
        %v1541 = vmul.f32 %v1519, %v1540
        %v1542 = vpack.c.bf16 %v1541, %v1541
        %v1543 = vld [vmem:[%s634] sm:$0xf]
        %v1544 = vld [vmem:[%s634 + $0x4] sm:$0xf]
        %v1545 = vld [vmem:[%s634 + $0x8] sm:$0xf]
        %v1546 = vld [vmem:[%s634 + $0xc] sm:$0xf]
        %v1547 = vld [vmem:[%s634 + $0x10] sm:$0xf]
        %v1548 = vld [vmem:[%s634 + $0x14] sm:$0xf]
        %v1549 = vld [vmem:[%s634 + $0x18] sm:$0xf]
        %v1550 = vld [vmem:[%s634 + $0x1c] sm:$0xf]
        %v1551 = vld [vmem:[%s589 + $0x11] sm:$0x1]
        %v1552 = vperm.slane %v1551, 0
        %v1561 = vunpack.c.l.b16 %v1543
        %v1562 = vunpack.c.l.b16 %v1544
        %v1563 = vunpack.c.l.b16 %v1545
        %v1564 = vunpack.c.l.b16 %v1546
        %v1565 = vunpack.c.l.b16 %v1547
        %v1566 = vunpack.c.l.b16 %v1548
        %v1567 = vunpack.c.l.b16 %v1549
        %v1568 = vunpack.c.l.b16 %v1550
        %v1569 = vpack.c.b16 %v1562, %v1561
        %v1570 = vpack.c.b16 %v1564, %v1563
        %v1571 = vpack.c.b16 %v1566, %v1565
        %v1572 = vpack.c.b16 %v1568, %v1567
        %v1578 = vsel %vm770, %v1542, 0
        %1580 = vmatpush.bf16.msra.mxu0 0
        %1581 = vmatpush.bf16.msra.mxu0 0
        %1582 = vmatpush.bf16.msra.mxu0 0
        %1583 = vmatpush.bf16.msra.mxu0 0
        %1584 = vmatpush.bf16.msra.mxu0 %v1572
        %1585 = vmatpush.bf16.msra.mxu0 %v1571
        %1586 = vmatpush.bf16.msra.mxu0 %v1570
        %1587 = vmatpush.bf16.msra.mxu0 %v1569
        %1588 = vmatmul.bf16.gmra.mxu0 %v1578
        %v1589 = vpop.f32.mrf.mxu0
        %v1590 = vadd.f32 %v1552, %v1589
        %v1591 = vpop.f32.mrf.mxu0
        %1592 = vdwg.mxu0
        %v1593 = vmul.f32 %v1590, 0.5
        %v1594 = vadd.f32 %v1458, %v1593
        %v1595 = vld [vmem:[%s589 + $0x12] sm:$0x1]
        %v1596 = vld [vmem:[%s589 + $0x13] sm:$0x1]
        %v1597 = vsel %vm646, %v1594, 0.0
        %1598 = vadd.xlane.f32.xlu0 %v1597
        %v1599 = vpop.xlane.xlu0 %1598
        %v1600 = vmul.f32 %v1599, %v656
        %v1601 = vsub.f32 %v1594, %v1600
        %v1602 = vmul.f32 %v1601, %v1601
        %v1603 = vsel %vm646, %v1602, 0.0
        %1604 = vadd.xlane.f32.xlu0 %v1603
        %v1605 = vpop.xlane.xlu0 %1604
        %v1606 = vmul.f32 %v1605, %v656
        %v1607 = vadd.f32 %v1606, 1e-05
        %v1608 = vrsqrt.pop %v1607
        %v1609 = vmul.f32 %v1608, %v1607
        %v1610 = vmul.f32 %v1609, %v1608
        %v1611 = vmul.f32 0.5, %v1610
        %v1612 = vsub.f32 1.5, %v1611
        %v1613 = vmul.f32 %v1608, %v1612
        %vm1614 = vweird.f32 %v1607
        %vm1615 = vweird.f32 %v1608
        %vm1616 = vmor %vm1614, %vm1615
        %v1617 = vsel %vm1616, %v1608, %v1613
        %v1618 = vmul.f32 %v1601, %v1617
        %v1619 = vperm.slane %v1595, 0
        %v1620 = vmul.f32 %v1618, %v1619
        %v1621 = vperm.slane %v1596, 0
        %v1622 = vadd.f32 %v1620, %v1621
        %1623 = vst.msk [vmem:[%s577] sm:$0xff] %vm646, %v1622
        %s1624 = sand.u32 %s358, 1
        %s1625 = scalar_lea.sflag [#allocation3], %s1624
        %s1626 = sand.u32 %s358, 1
        %s1627 = smul.addr %s1626, 8
        %s1628 = scalar_lea.vmem [#allocation2], %s1627
        // Predicated region
        $region73: #{encoder_forward.1} parent=67 // pred_check
          %p1629 = pneg %p368
        $region74: #{encoder_forward.1} parent=67 // pred_check_branch
          %1631 = sbr.rel (%p1629) target = $region76
        $region75: #{encoder_forward.1} parent=67 // pred_region
          %1633 = vsyncadd %s1625, 0
          %s1634 = smul.addr %s30, 8
          %s1635 = scalar_lea.hbm %s12, %s1634
          %s1637 = sshll.u32 %s1628, 4
          %s1638 = int_to_ptr.vmem [resolvable:$true] %s1637
          %s1639 = sshll.u32 %s1635, 4
          %s1640 = int_to_ptr.hbm [resolvable:$true] %s1639
          %1642 = dma.vmem_to_hbm [thread:$0]  %s1638, 128, %s1640, %s1625
        $region76: #{encoder_forward.1} parent=67 // pred_fallthru
          _
      $region68: #{encoder_forward.1} parent=5 // pred_fallthru
        _
      %p1643 = scmp.le.s32.totalorder 2, %s21
      // Predicated region
      $region77: #{encoder_forward.1} parent=5 // pred_check
        %p1644 = pneg %p1643
      $region78: #{encoder_forward.1} parent=5 // pred_check_branch
        %1646 = sbr.rel (%p1644) target = $region80
      $region79: #{encoder_forward.1} parent=5 // pred_region
        %s1647 = ssub.s32 %s21, 2
        // Predicated region
        $region81: #{encoder_forward.1} parent=79 // pred_check
          %p1648 = pneg %p374
        $region82: #{encoder_forward.1} parent=79 // pred_check_branch
          %1650 = sbr.rel (%p1648) target = $region84
        $region83: #{encoder_forward.1} parent=79 // pred_region
          %s1651 = sand.u32 %s359, 1
          %s1652 = scalar_lea.sflag [#allocation3], %s1651
          %s1653 = sand.u32 %s359, 1
          %s1654 = smul.addr %s1653, 8
          %s1655 = scalar_lea.vmem [#allocation2], %s1654
          %1657 = dma.done %s1652, 128
        $region84: #{encoder_forward.1} parent=79 // pred_fallthru
          _
      $region80: #{encoder_forward.1} parent=5 // pred_fallthru
        _
    $region6: #{encoder_forward.1} parent=1 // loop_footer
      %s25 = sadd.s32 1, %s21
    $region7: #{encoder_forward.1} parent=1 // loop_footer_branch
      %20 = sbr.rel target = $region3
    $region8: #{encoder_forward.1} parent=1 // loop_exit
      _
    %1658 = vsyncpa [#allocation3], 1
    %s1659 = scalar_lea.sflag [#allocation3], 1
    %1660 = vsyncpa %s1659, 1

</llo_original>
